<compile_context>
chip_gen: v5e
topology: v5e:2x2
jax: 0.10.0
libtpu: 0.0.40
codegen_flags: <defaults>
</compile_context>

<pallas_src>
import functools

import jax
import jax.numpy as jnp
from jax.experimental import pallas as pl
from jax.experimental.pallas import tpu as pltpu


def _tile(total: int, cap: int, quantum: int) -> int:
    """Largest tile <= cap that divides `total` and is a multiple of `quantum`.
    Falls back to the full dim (always a legal BlockSpec block)."""
    if total <= cap:
        return total
    t = (cap // quantum) * quantum
    while t >= quantum:
        if total % t == 0:
            return t
        t -= quantum
    return total


def _round_up(x: int, m: int) -> int:
    return ((x + m - 1) // m) * m


# ---------------------------------------------------------------------------
# Kernel 1: fused per-pixel channel mean + max (reduction over C, tiled)
#           -> single (N, 2, HW) output: channel 0 = mean, channel 1 = max.
# ---------------------------------------------------------------------------
def _channel_pool_kernel(x_ref, p_ref, *, inv_c):
    c = pl.program_id(2)
    x = x_ref[0]                               # (TC, THW) f32
    s = jnp.sum(x, axis=0, keepdims=True)      # (1, THW)  cross-sublane (XLU)
    m = jnp.max(x, axis=0, keepdims=True)      # (1, THW)

    @pl.when(c == 0)
    def _():
        p_ref[0, 0:1, :] = s
        p_ref[0, 1:2, :] = m

    @pl.when(c > 0)
    def _():
        p_ref[0, 0:1, :] = p_ref[0, 0:1, :] + s
        p_ref[0, 1:2, :] = jnp.maximum(p_ref[0, 1:2, :], m)

    @pl.when(c == pl.num_programs(2) - 1)
    def _():
        p_ref[0, 0:1, :] = p_ref[0, 0:1, :] * inv_c    # finalize: sum -> mean


def channel_pool(x_2d):
    """x_2d: (N, C, HW) f32  ->  pooled (N, 2, HW) f32 (avg ch0, max ch1)."""
    N, C, HW = x_2d.shape

    # Channel-reduction tile always divides C exactly (no padded channels -> the
    # max/mean never see garbage).  C in pix2pixHD is a nice power of two.
    TC = _tile(C, cap=512, quantum=8)

    # Spatial tile: lane-dense, ~8 MiB per input block (amortizes the ~0.35us/step
    # pipeline tax against the HBM roofline), cdiv grid handles any H*W.
    thw_cap = max(128, min(8192, ((2 * 1024 * 1024) // TC) // 128 * 128))
    THW = min(thw_cap, _round_up(HW, 128))
    # v7x has 2 TensorCores: ensure >= 2 parallel grid units when N is small.
    if N * pl.cdiv(HW, THW) < 2 and THW % 256 == 0:
        THW //= 2

    grid = (N, pl.cdiv(HW, THW), C // TC)

    vmem_bytes = 2 * (TC * THW + 2 * THW) * 4 + (8 << 20)   # double-buffered blocks
    vmem_bytes = int(min(max(vmem_bytes, 32 << 20), 48 << 20))

    kernel = functools.partial(_channel_pool_kernel, inv_c=1.0 / float(C))
    return pl.pallas_call(
        kernel,
        grid=grid,
        in_specs=[pl.BlockSpec((1, TC, THW), lambda n, s, c: (n, c, s))],
        out_specs=pl.BlockSpec((1, 2, THW), lambda n, s, c: (n, 0, s)),
        out_shape=jax.ShapeDtypeStruct((N, 2, HW), jnp.float32),
        compiler_params=pltpu.CompilerParams(
            dimension_semantics=("parallel", "parallel", "arbitrary"),
            vmem_limit_bytes=vmem_bytes),
        cost_estimate=pl.CostEstimate(
            flops=2 * N * C * HW,
            transcendentals=0,
            bytes_accessed=4 * (N * C * HW + 2 * N * HW)),
    )(x_2d)


# ---------------------------------------------------------------------------
# Kernel 2: 7x7 conv (2 -> 1 channel, no bias) + sigmoid.
#   Zero padding is materialized only in a VMEM scratch (never in HBM).
#   Taps are applied as 14 row-slab loads + pltpu.roll lane shifts.
# ---------------------------------------------------------------------------
def _conv_sigmoid_kernel(p_ref, w_ref, o_ref, buf_ref, *, ksize, H, W):
    # p_ref:   (1, 2, H, W)  pooled map (avg ch0, max ch1)
    # w_ref:   (2*k*k,) f32 in SMEM, (cin, kh, kw) order
    # o_ref:   (1, H, W)
    # buf_ref: (2, H+2*pad, Wp) VMEM scratch, Wp lane-aligned; image at (pad, pad)
    pad = ksize // 2
    Wp = buf_ref.shape[2]

    # Zero-fill + copy the unpadded pooled block into the interior.
    buf_ref[...] = jnp.zeros_like(buf_ref)
    for ci in range(2):
        buf_ref[ci, pl.ds(pad, H), pl.ds(pad, W)] = p_ref[0, ci]

    # Shift-and-accumulate over the 2*k*k taps.  One row-slab load per (ci, kh);
    # the kw shift is a circular lane roll (XLU), wrap-around lands in columns
    # >= W which are sliced off below.
    acc = jnp.zeros((H, Wp), jnp.float32)
    for ci in range(2):
        for di in range(ksize):
            slab = buf_ref[ci, pl.ds(di, H), :]            # (H, Wp)
            for dj in range(ksize):
                wv = w_ref[ci * ksize * ksize + di * ksize + dj]
                shifted = slab if dj == 0 else pltpu.roll(slab, Wp - dj, axis=1)
                acc = acc + wv * shifted

    out = acc[:, :W]
    o_ref[0] = 1.0 / (1.0 + jnp.exp(-out))


def conv_sigmoid(pooled, w_flat, ksize):
    """pooled: (N, 2, H, W) f32, w_flat: (2*k*k,) f32 -> (N, H, W) f32."""
    N, _, H, W = pooled.shape
    pad = ksize // 2
    Hp = H + 2 * pad
    Wp = _round_up(W + 2 * pad, 128)          # lane-aligned scratch width

    vmem_bytes = (2 * 2 * H * W + 2 * H * W + 2 * Hp * Wp) * 4 + (4 << 20)
    vmem_bytes = int(min(max(vmem_bytes, 16 << 20), 48 << 20))

    kernel = functools.partial(_conv_sigmoid_kernel, ksize=ksize, H=H, W=W)
    return pl.pallas_call(
        kernel,
        grid=(N,),
        in_specs=[
            pl.BlockSpec((1, 2, H, W), lambda n: (n, 0, 0, 0)),
            pl.BlockSpec(memory_space=pltpu.MemorySpace.SMEM),
        ],
        out_specs=pl.BlockSpec((1, H, W), lambda n: (n, 0, 0)),
        out_shape=jax.ShapeDtypeStruct((N, H, W), jnp.float32),
        scratch_shapes=[pltpu.VMEM((2, Hp, Wp), jnp.float32)],
        compiler_params=pltpu.CompilerParams(
            dimension_semantics=("parallel",),
            vmem_limit_bytes=vmem_bytes),
        cost_estimate=pl.CostEstimate(
            flops=2 * N * H * W * 2 * ksize * ksize,
            transcendentals=N * H * W,
            bytes_accessed=4 * (N * 2 * H * W + N * H * W)),
    )(pooled, w_flat)


# ---------------------------------------------------------------------------
# Full forward (matches PyTorch SpatialAttention.forward)
# ---------------------------------------------------------------------------
def spatial_attention_forward(x_nchw, w_oihw, ksize=7):
    N, C, H, W = x_nchw.shape

    # Kernel 1: fused channel mean + max -> (N, 2, H*W); single HBM write,
    # no jnp.stack / jnp.pad glue.
    pooled = channel_pool(x_nchw.reshape(N, C, H * W)).reshape(N, 2, H, W)

    # Kernel 2: 7x7 conv (2->1, no bias) + sigmoid; padding handled in VMEM.
    w_flat = w_oihw[0].reshape(-1)            # (2*k*k,) in (cin, kh, kw) order
    out = conv_sigmoid(pooled, w_flat, ksize)
    return out.reshape(N, 1, H, W)


def _reference(x, w, ksize=7):
    pad = ksize // 2
    avg = jnp.mean(x, axis=1, keepdims=True)
    mx = jnp.max(x, axis=1, keepdims=True)
    cat = jnp.concatenate([avg, mx], axis=1)
    y = jax.lax.conv_general_dilated(
        cat, w, window_strides=(1, 1), padding=[(pad, pad), (pad, pad)],
        dimension_numbers=("NCHW", "OIHW", "NCHW"),
        precision=jax.lax.Precision.HIGHEST)
    return jax.nn.sigmoid(y)


# ---------------------------------------------------------------------------
if __name__ == "__main__":
    N, C, H, W = 2, 4, 16, 16
    ksize = 7

    root = jax.random.PRNGKey(0)
    kx, kw = jax.random.split(root)
    x = jax.random.normal(kx, (N, C, H, W), dtype=jnp.float32)
    # Conv2d(2, 1, 7, bias=False) weight, PyTorch-like uniform init.
    fan_in = 2 * ksize * ksize
    bound = 1.0 / (fan_in ** 0.5)
    w = jax.random.uniform(kw, (1, 2, ksize, ksize), dtype=jnp.float32,
                           minval=-bound, maxval=bound)

    fwd = jax.jit(functools.partial(spatial_attention_forward, ksize=ksize))
    out = jax.block_until_ready(fwd(x, w))

    ref = jax.block_until_ready(_reference(x, w, ksize))
    err = float(jnp.max(jnp.abs(out - ref)))
    if not bool(jnp.allclose(out, ref, atol=1e-3, rtol=1e-3)):
        raise SystemExit("mismatch vs reference, max abs err = %e" % err)

    print("KERNEL_OK")
</pallas_src>

<mosaic_0001>
module attributes {stable_mosaic.version = 11 : i64} {
  func.func @_channel_pool_kernel(%arg0: i32, %arg1: i32, %arg2: i32, %arg3: memref<1x4x256xf32, #tpu.memory_space<vmem>>, %arg4: memref<1x2x256xf32, #tpu.memory_space<vmem>>) attributes {dimension_semantics = [#tpu.dimension_semantics<parallel>, #tpu.dimension_semantics<parallel>, #tpu.dimension_semantics<arbitrary>], iteration_bounds = array<i64: 2, 1, 1>, scalar_prefetch = 0 : i64, scratch_operands = 0 : i64, tpu.core_type = #tpu.core_type<tc>, window_params = [{transform_indices = @transform_0, window_bounds = array<i64: 1, 4, 256>}, {transform_indices = @transform_1, window_bounds = array<i64: 1, 2, 256>}]} {
    %c0 = arith.constant 0 : index
    %c0_0 = arith.constant 0 : index
    %c0_1 = arith.constant 0 : index
    %0 = vector.load %arg3[%c0, %c0_0, %c0_1] : memref<1x4x256xf32, #tpu.memory_space<vmem>>, vector<1x4x256xf32>
    %1 = vector.shape_cast %0 : vector<1x4x256xf32> to vector<4x256xf32>
    %cst = arith.constant dense<0.000000e+00> : vector<256xf32>
    %2 = vector.multi_reduction <add>, %1, %cst [0] : vector<4x256xf32> to vector<256xf32>
    %3 = vector.shape_cast %2 : vector<256xf32> to vector<1x256xf32>
    %cst_2 = arith.constant dense<0xFF800000> : vector<256xf32>
    %4 = vector.multi_reduction <maximumf>, %1, %cst_2 [0] : vector<4x256xf32> to vector<256xf32>
    %5 = vector.shape_cast %4 : vector<256xf32> to vector<1x256xf32>
    %c0_i32 = arith.constant 0 : i32
    %6 = arith.cmpi eq, %arg2, %c0_i32 : i32
    %7 = arith.extui %6 : i1 to i32
    %c0_i32_3 = arith.constant 0 : i32
    %8 = arith.cmpi ne, %7, %c0_i32_3 : i32
    scf.if %8 {
      %c0_8 = arith.constant 0 : index
      %c0_9 = arith.constant 0 : index
      %c0_10 = arith.constant 0 : index
      %15 = vector.load %arg4[%c0_8, %c0_9, %c0_10] : memref<1x2x256xf32, #tpu.memory_space<vmem>>, vector<1x1x256xf32>
      %16 = vector.shape_cast %15 : vector<1x1x256xf32> to vector<1x256xf32>
      %17 = vector.shape_cast %3 : vector<1x256xf32> to vector<1x1x256xf32>
      tpu.vector_store %arg4[%c0_8, %c0_9, %c0_10], %17 {strides = array<i32>} : memref<1x2x256xf32, #tpu.memory_space<vmem>>, vector<1x1x256xf32>,
      %c0_11 = arith.constant 0 : index
      %c1 = arith.constant 1 : index
      %c0_12 = arith.constant 0 : index
      %18 = vector.load %arg4[%c0_11, %c1, %c0_12] : memref<1x2x256xf32, #tpu.memory_space<vmem>>, vector<1x1x256xf32>
      %19 = vector.shape_cast %18 : vector<1x1x256xf32> to vector<1x256xf32>
      %20 = vector.shape_cast %5 : vector<1x256xf32> to vector<1x1x256xf32>
      tpu.vector_store %arg4[%c0_11, %c1, %c0_12], %20 {strides = array<i32>} : memref<1x2x256xf32, #tpu.memory_space<vmem>>, vector<1x1x256xf32>,
    } else {
    }
    %c0_i32_4 = arith.constant 0 : i32
    %9 = arith.cmpi sgt, %arg2, %c0_i32_4 : i32
    %10 = arith.extui %9 : i1 to i32
    %c0_i32_5 = arith.constant 0 : i32
    %11 = arith.cmpi ne, %10, %c0_i32_5 : i32
    scf.if %11 {
      %c0_8 = arith.constant 0 : index
      %c0_9 = arith.constant 0 : index
      %c0_10 = arith.constant 0 : index
      %15 = vector.load %arg4[%c0_8, %c0_9, %c0_10] : memref<1x2x256xf32, #tpu.memory_space<vmem>>, vector<1x1x256xf32>
      %16 = vector.shape_cast %15 : vector<1x1x256xf32> to vector<1x256xf32>
      %17 = arith.addf %16, %3 : vector<1x256xf32>
      %c0_11 = arith.constant 0 : index
      %c0_12 = arith.constant 0 : index
      %c0_13 = arith.constant 0 : index
      %18 = vector.load %arg4[%c0_11, %c0_12, %c0_13] : memref<1x2x256xf32, #tpu.memory_space<vmem>>, vector<1x1x256xf32>
      %19 = vector.shape_cast %18 : vector<1x1x256xf32> to vector<1x256xf32>
      %20 = vector.shape_cast %17 : vector<1x256xf32> to vector<1x1x256xf32>
      tpu.vector_store %arg4[%c0_11, %c0_12, %c0_13], %20 {strides = array<i32>} : memref<1x2x256xf32, #tpu.memory_space<vmem>>, vector<1x1x256xf32>,
      %c0_14 = arith.constant 0 : index
      %c1 = arith.constant 1 : index
      %c0_15 = arith.constant 0 : index
      %21 = vector.load %arg4[%c0_14, %c1, %c0_15] : memref<1x2x256xf32, #tpu.memory_space<vmem>>, vector<1x1x256xf32>
      %22 = vector.shape_cast %21 : vector<1x1x256xf32> to vector<1x256xf32>
      %23 = arith.maximumf %22, %5 : vector<1x256xf32>
      %c0_16 = arith.constant 0 : index
      %c1_17 = arith.constant 1 : index
      %c0_18 = arith.constant 0 : index
      %24 = vector.load %arg4[%c0_16, %c1_17, %c0_18] : memref<1x2x256xf32, #tpu.memory_space<vmem>>, vector<1x1x256xf32>
      %25 = vector.shape_cast %24 : vector<1x1x256xf32> to vector<1x256xf32>
      %26 = vector.shape_cast %23 : vector<1x256xf32> to vector<1x1x256xf32>
      tpu.vector_store %arg4[%c0_16, %c1_17, %c0_18], %26 {strides = array<i32>} : memref<1x2x256xf32, #tpu.memory_space<vmem>>, vector<1x1x256xf32>,
    } else {
    }
    %c0_i32_6 = arith.constant 0 : i32
    %12 = arith.cmpi eq, %arg2, %c0_i32_6 : i32
    %13 = arith.extui %12 : i1 to i32
    %c0_i32_7 = arith.constant 0 : i32
    %14 = arith.cmpi ne, %13, %c0_i32_7 : i32
    scf.if %14 {
      %c0_8 = arith.constant 0 : index
      %c0_9 = arith.constant 0 : index
      %c0_10 = arith.constant 0 : index
      %15 = vector.load %arg4[%c0_8, %c0_9, %c0_10] : memref<1x2x256xf32, #tpu.memory_space<vmem>>, vector<1x1x256xf32>
      %16 = vector.shape_cast %15 : vector<1x1x256xf32> to vector<1x256xf32>
      %cst_11 = arith.constant 2.500000e-01 : f32
      %17 = vector.broadcast %cst_11 : f32 to vector<1x256xf32>
      %18 = arith.mulf %16, %17 : vector<1x256xf32>
      %c0_12 = arith.constant 0 : index
      %c0_13 = arith.constant 0 : index
      %c0_14 = arith.constant 0 : index
      %19 = vector.load %arg4[%c0_12, %c0_13, %c0_14] : memref<1x2x256xf32, #tpu.memory_space<vmem>>, vector<1x1x256xf32>
      %20 = vector.shape_cast %19 : vector<1x1x256xf32> to vector<1x256xf32>
      %21 = vector.shape_cast %18 : vector<1x256xf32> to vector<1x1x256xf32>
      tpu.vector_store %arg4[%c0_12, %c0_13, %c0_14], %21 {strides = array<i32>} : memref<1x2x256xf32, #tpu.memory_space<vmem>>, vector<1x1x256xf32>,
    } else {
    }
    return
  }
  func.func @transform_0(%arg0: i32, %arg1: i32, %arg2: i32) -> (i32, i32, i32) {
    %c0_i32 = arith.constant 0 : i32
    return %arg0, %arg2, %arg1 : i32, i32, i32
  }
  func.func @transform_1(%arg0: i32, %arg1: i32, %arg2: i32) -> (i32, i32, i32) {
    %c0_i32 = arith.constant 0 : i32
    %c0_i32_0 = arith.constant 0 : i32
    return %arg0, %c0_i32, %arg1 : i32, i32, i32
  }
}

module attributes {stable_mosaic.version = 11 : i64} {
  func.func @_conv_sigmoid_kernel(%arg0: i32, %arg1: memref<1x2x16x16xf32, #tpu.memory_space<vmem>>, %arg2: memref<98xf32, #tpu.memory_space<smem>>, %arg3: memref<1x16x16xf32, #tpu.memory_space<vmem>>, %arg4: memref<2x22x128xf32, #tpu.memory_space<vmem>>) attributes {dimension_semantics = [#tpu.dimension_semantics<parallel>], iteration_bounds = array<i64: 2>, scalar_prefetch = 0 : i64, scratch_operands = 1 : i64, tpu.core_type = #tpu.core_type<tc>, window_params = [{transform_indices = @transform_0, window_bounds = array<i64: 1, 2, 16, 16>}, {transform_indices = @transform_1, window_bounds = array<i64: 98>}, {transform_indices = @transform_2, window_bounds = array<i64: 1, 16, 16>}]} {
    %cst = arith.constant 0.000000e+00 : f32
    %0 = vector.broadcast %cst : f32 to vector<2x22x128xf32>
    %c0 = arith.constant 0 : index
    %c0_0 = arith.constant 0 : index
    %c0_1 = arith.constant 0 : index
    %1 = vector.load %arg4[%c0, %c0_0, %c0_1] : memref<2x22x128xf32, #tpu.memory_space<vmem>>, vector<2x22x128xf32>
    tpu.vector_store %arg4[%c0, %c0_0, %c0_1], %0 {strides = array<i32>} : memref<2x22x128xf32, #tpu.memory_space<vmem>>, vector<2x22x128xf32>,
    %c0_2 = arith.constant 0 : index
    %c0_3 = arith.constant 0 : index
    %c0_4 = arith.constant 0 : index
    %c0_5 = arith.constant 0 : index
    %2 = vector.load %arg1[%c0_2, %c0_3, %c0_4, %c0_5] : memref<1x2x16x16xf32, #tpu.memory_space<vmem>>, vector<1x1x16x16xf32>
    %3 = vector.shape_cast %2 : vector<1x1x16x16xf32> to vector<16x16xf32>
    %c0_6 = arith.constant 0 : index
    %c3 = arith.constant 3 : index
    %c3_7 = arith.constant 3 : index
    %4 = vector.load %arg4[%c0_6, %c3, %c3_7] : memref<2x22x128xf32, #tpu.memory_space<vmem>>, vector<1x16x16xf32>
    %5 = vector.shape_cast %4 : vector<1x16x16xf32> to vector<16x16xf32>
    %6 = vector.shape_cast %3 : vector<16x16xf32> to vector<1x16x16xf32>
    tpu.vector_store %arg4[%c0_6, %c3, %c3_7], %6 {strides = array<i32>} : memref<2x22x128xf32, #tpu.memory_space<vmem>>, vector<1x16x16xf32>,
    %c0_8 = arith.constant 0 : index
    %c1 = arith.constant 1 : index
    %c0_9 = arith.constant 0 : index
    %c0_10 = arith.constant 0 : index
    %7 = vector.load %arg1[%c0_8, %c1, %c0_9, %c0_10] : memref<1x2x16x16xf32, #tpu.memory_space<vmem>>, vector<1x1x16x16xf32>
    %8 = vector.shape_cast %7 : vector<1x1x16x16xf32> to vector<16x16xf32>
    %c1_11 = arith.constant 1 : index
    %c3_12 = arith.constant 3 : index
    %c3_13 = arith.constant 3 : index
    %9 = vector.load %arg4[%c1_11, %c3_12, %c3_13] : memref<2x22x128xf32, #tpu.memory_space<vmem>>, vector<1x16x16xf32>
    %10 = vector.shape_cast %9 : vector<1x16x16xf32> to vector<16x16xf32>
    %11 = vector.shape_cast %8 : vector<16x16xf32> to vector<1x16x16xf32>
    tpu.vector_store %arg4[%c1_11, %c3_12, %c3_13], %11 {strides = array<i32>} : memref<2x22x128xf32, #tpu.memory_space<vmem>>, vector<1x16x16xf32>,
    %cst_14 = arith.constant 0.000000e+00 : f32
    %12 = vector.broadcast %cst_14 : f32 to vector<16x128xf32>
    %c0_15 = arith.constant 0 : index
    %c0_16 = arith.constant 0 : index
    %c0_17 = arith.constant 0 : index
    %13 = vector.load %arg4[%c0_15, %c0_16, %c0_17] : memref<2x22x128xf32, #tpu.memory_space<vmem>>, vector<1x16x128xf32>
    %14 = vector.shape_cast %13 : vector<1x16x128xf32> to vector<16x128xf32>
    %c0_18 = arith.constant 0 : index
    %15 = memref.load %arg2[%c0_18] : memref<98xf32, #tpu.memory_space<smem>>
    %16 = vector.broadcast %15 : f32 to vector<16x128xf32>
    %17 = arith.mulf %16, %14 : vector<16x128xf32>
    %18 = arith.addf %12, %17 : vector<16x128xf32>
    %c1_19 = arith.constant 1 : index
    %19 = memref.load %arg2[%c1_19] : memref<98xf32, #tpu.memory_space<smem>>
    %c127_i32 = arith.constant 127 : i32
    %20 = tpu.dynamic_rotate %14 by %c127_i32 dim 1 : vector<16x128xf32>, i32 -> vector<16x128xf32>
    %21 = vector.broadcast %19 : f32 to vector<16x128xf32>
    %22 = arith.mulf %21, %20 : vector<16x128xf32>
    %23 = arith.addf %18, %22 : vector<16x128xf32>
    %c2 = arith.constant 2 : index
    %24 = memref.load %arg2[%c2] : memref<98xf32, #tpu.memory_space<smem>>
    %c126_i32 = arith.constant 126 : i32
    %25 = tpu.dynamic_rotate %14 by %c126_i32 dim 1 : vector<16x128xf32>, i32 -> vector<16x128xf32>
    %26 = vector.broadcast %24 : f32 to vector<16x128xf32>
    %27 = arith.mulf %26, %25 : vector<16x128xf32>
    %28 = arith.addf %23, %27 : vector<16x128xf32>
    %c3_20 = arith.constant 3 : index
    %29 = memref.load %arg2[%c3_20] : memref<98xf32, #tpu.memory_space<smem>>
    %c125_i32 = arith.constant 125 : i32
    %30 = tpu.dynamic_rotate %14 by %c125_i32 dim 1 : vector<16x128xf32>, i32 -> vector<16x128xf32>
    %31 = vector.broadcast %29 : f32 to vector<16x128xf32>
    %32 = arith.mulf %31, %30 : vector<16x128xf32>
    %33 = arith.addf %28, %32 : vector<16x128xf32>
    %c4 = arith.constant 4 : index
    %34 = memref.load %arg2[%c4] : memref<98xf32, #tpu.memory_space<smem>>
    %c124_i32 = arith.constant 124 : i32
    %35 = tpu.dynamic_rotate %14 by %c124_i32 dim 1 : vector<16x128xf32>, i32 -> vector<16x128xf32>
    %36 = vector.broadcast %34 : f32 to vector<16x128xf32>
    %37 = arith.mulf %36, %35 : vector<16x128xf32>
    %38 = arith.addf %33, %37 : vector<16x128xf32>
    %c5 = arith.constant 5 : index
    %39 = memref.load %arg2[%c5] : memref<98xf32, #tpu.memory_space<smem>>
    %c123_i32 = arith.constant 123 : i32
    %40 = tpu.dynamic_rotate %14 by %c123_i32 dim 1 : vector<16x128xf32>, i32 -> vector<16x128xf32>
    %41 = vector.broadcast %39 : f32 to vector<16x128xf32>
    %42 = arith.mulf %41, %40 : vector<16x128xf32>
    %43 = arith.addf %38, %42 : vector<16x128xf32>
    %c6 = arith.constant 6 : index
    %44 = memref.load %arg2[%c6] : memref<98xf32, #tpu.memory_space<smem>>
    %c122_i32 = arith.constant 122 : i32
    %45 = tpu.dynamic_rotate %14 by %c122_i32 dim 1 : vector<16x128xf32>, i32 -> vector<16x128xf32>
    %46 = vector.broadcast %44 : f32 to vector<16x128xf32>
    %47 = arith.mulf %46, %45 : vector<16x128xf32>
    %48 = arith.addf %43, %47 : vector<16x128xf32>
    %c0_21 = arith.constant 0 : index
    %c1_22 = arith.constant 1 : index
    %c0_23 = arith.constant 0 : index
    %49 = vector.load %arg4[%c0_21, %c1_22, %c0_23] : memref<2x22x128xf32, #tpu.memory_space<vmem>>, vector<1x16x128xf32>
    %50 = vector.shape_cast %49 : vector<1x16x128xf32> to vector<16x128xf32>
    %c7 = arith.constant 7 : index
    %51 = memref.load %arg2[%c7] : memref<98xf32, #tpu.memory_space<smem>>
    %52 = vector.broadcast %51 : f32 to vector<16x128xf32>
    %53 = arith.mulf %52, %50 : vector<16x128xf32>
    %54 = arith.addf %48, %53 : vector<16x128xf32>
    %c8 = arith.constant 8 : index
    %55 = memref.load %arg2[%c8] : memref<98xf32, #tpu.memory_space<smem>>
    %c127_i32_24 = arith.constant 127 : i32
    %56 = tpu.dynamic_rotate %50 by %c127_i32_24 dim 1 : vector<16x128xf32>, i32 -> vector<16x128xf32>
    %57 = vector.broadcast %55 : f32 to vector<16x128xf32>
    %58 = arith.mulf %57, %56 : vector<16x128xf32>
    %59 = arith.addf %54, %58 : vector<16x128xf32>
    %c9 = arith.constant 9 : index
    %60 = memref.load %arg2[%c9] : memref<98xf32, #tpu.memory_space<smem>>
    %c126_i32_25 = arith.constant 126 : i32
    %61 = tpu.dynamic_rotate %50 by %c126_i32_25 dim 1 : vector<16x128xf32>, i32 -> vector<16x128xf32>
    %62 = vector.broadcast %60 : f32 to vector<16x128xf32>
    %63 = arith.mulf %62, %61 : vector<16x128xf32>
    %64 = arith.addf %59, %63 : vector<16x128xf32>
    %c10 = arith.constant 10 : index
    %65 = memref.load %arg2[%c10] : memref<98xf32, #tpu.memory_space<smem>>
    %c125_i32_26 = arith.constant 125 : i32
    %66 = tpu.dynamic_rotate %50 by %c125_i32_26 dim 1 : vector<16x128xf32>, i32 -> vector<16x128xf32>
    %67 = vector.broadcast %65 : f32 to vector<16x128xf32>
    %68 = arith.mulf %67, %66 : vector<16x128xf32>
    %69 = arith.addf %64, %68 : vector<16x128xf32>
    %c11 = arith.constant 11 : index
    %70 = memref.load %arg2[%c11] : memref<98xf32, #tpu.memory_space<smem>>
    %c124_i32_27 = arith.constant 124 : i32
    %71 = tpu.dynamic_rotate %50 by %c124_i32_27 dim 1 : vector<16x128xf32>, i32 -> vector<16x128xf32>
    %72 = vector.broadcast %70 : f32 to vector<16x128xf32>
    %73 = arith.mulf %72, %71 : vector<16x128xf32>
    %74 = arith.addf %69, %73 : vector<16x128xf32>
    %c12 = arith.constant 12 : index
    %75 = memref.load %arg2[%c12] : memref<98xf32, #tpu.memory_space<smem>>
    %c123_i32_28 = arith.constant 123 : i32
    %76 = tpu.dynamic_rotate %50 by %c123_i32_28 dim 1 : vector<16x128xf32>, i32 -> vector<16x128xf32>
    %77 = vector.broadcast %75 : f32 to vector<16x128xf32>
    %78 = arith.mulf %77, %76 : vector<16x128xf32>
    %79 = arith.addf %74, %78 : vector<16x128xf32>
    %c13 = arith.constant 13 : index
    %80 = memref.load %arg2[%c13] : memref<98xf32, #tpu.memory_space<smem>>
    %c122_i32_29 = arith.constant 122 : i32
    %81 = tpu.dynamic_rotate %50 by %c122_i32_29 dim 1 : vector<16x128xf32>, i32 -> vector<16x128xf32>
    %82 = vector.broadcast %80 : f32 to vector<16x128xf32>
    %83 = arith.mulf %82, %81 : vector<16x128xf32>
    %84 = arith.addf %79, %83 : vector<16x128xf32>
    %c0_30 = arith.constant 0 : index
    %c2_31 = arith.constant 2 : index
    %c0_32 = arith.constant 0 : index
    %85 = vector.load %arg4[%c0_30, %c2_31, %c0_32] : memref<2x22x128xf32, #tpu.memory_space<vmem>>, vector<1x16x128xf32>
    %86 = vector.shape_cast %85 : vector<1x16x128xf32> to vector<16x128xf32>
    %c14 = arith.constant 14 : index
    %87 = memref.load %arg2[%c14] : memref<98xf32, #tpu.memory_space<smem>>
    %88 = vector.broadcast %87 : f32 to vector<16x128xf32>
    %89 = arith.mulf %88, %86 : vector<16x128xf32>
    %90 = arith.addf %84, %89 : vector<16x128xf32>
    %c15 = arith.constant 15 : index
    %91 = memref.load %arg2[%c15] : memref<98xf32, #tpu.memory_space<smem>>
    %c127_i32_33 = arith.constant 127 : i32
    %92 = tpu.dynamic_rotate %86 by %c127_i32_33 dim 1 : vector<16x128xf32>, i32 -> vector<16x128xf32>
    %93 = vector.broadcast %91 : f32 to vector<16x128xf32>
    %94 = arith.mulf %93, %92 : vector<16x128xf32>
    %95 = arith.addf %90, %94 : vector<16x128xf32>
    %c16 = arith.constant 16 : index
    %96 = memref.load %arg2[%c16] : memref<98xf32, #tpu.memory_space<smem>>
    %c126_i32_34 = arith.constant 126 : i32
    %97 = tpu.dynamic_rotate %86 by %c126_i32_34 dim 1 : vector<16x128xf32>, i32 -> vector<16x128xf32>
    %98 = vector.broadcast %96 : f32 to vector<16x128xf32>
    %99 = arith.mulf %98, %97 : vector<16x128xf32>
    %100 = arith.addf %95, %99 : vector<16x128xf32>
    %c17 = arith.constant 17 : index
    %101 = memref.load %arg2[%c17] : memref<98xf32, #tpu.memory_space<smem>>
    %c125_i32_35 = arith.constant 125 : i32
    %102 = tpu.dynamic_rotate %86 by %c125_i32_35 dim 1 : vector<16x128xf32>, i32 -> vector<16x128xf32>
    %103 = vector.broadcast %101 : f32 to vector<16x128xf32>
    %104 = arith.mulf %103, %102 : vector<16x128xf32>
    %105 = arith.addf %100, %104 : vector<16x128xf32>
    %c18 = arith.constant 18 : index
    %106 = memref.load %arg2[%c18] : memref<98xf32, #tpu.memory_space<smem>>
    %c124_i32_36 = arith.constant 124 : i32
    %107 = tpu.dynamic_rotate %86 by %c124_i32_36 dim 1 : vector<16x128xf32>, i32 -> vector<16x128xf32>
    %108 = vector.broadcast %106 : f32 to vector<16x128xf32>
    %109 = arith.mulf %108, %107 : vector<16x128xf32>
    %110 = arith.addf %105, %109 : vector<16x128xf32>
    %c19 = arith.constant 19 : index
    %111 = memref.load %arg2[%c19] : memref<98xf32, #tpu.memory_space<smem>>
    %c123_i32_37 = arith.constant 123 : i32
    %112 = tpu.dynamic_rotate %86 by %c123_i32_37 dim 1 : vector<16x128xf32>, i32 -> vector<16x128xf32>
    %113 = vector.broadcast %111 : f32 to vector<16x128xf32>
    %114 = arith.mulf %113, %112 : vector<16x128xf32>
    %115 = arith.addf %110, %114 : vector<16x128xf32>
    %c20 = arith.constant 20 : index
    %116 = memref.load %arg2[%c20] : memref<98xf32, #tpu.memory_space<smem>>
    %c122_i32_38 = arith.constant 122 : i32
    %117 = tpu.dynamic_rotate %86 by %c122_i32_38 dim 1 : vector<16x128xf32>, i32 -> vector<16x128xf32>
    %118 = vector.broadcast %116 : f32 to vector<16x128xf32>
    %119 = arith.mulf %118, %117 : vector<16x128xf32>
    %120 = arith.addf %115, %119 : vector<16x128xf32>
    %c0_39 = arith.constant 0 : index
    %c3_40 = arith.constant 3 : index
    %c0_41 = arith.constant 0 : index
    %121 = vector.load %arg4[%c0_39, %c3_40, %c0_41] : memref<2x22x128xf32, #tpu.memory_space<vmem>>, vector<1x16x128xf32>
    %122 = vector.shape_cast %121 : vector<1x16x128xf32> to vector<16x128xf32>
    %c21 = arith.constant 21 : index
    %123 = memref.load %arg2[%c21] : memref<98xf32, #tpu.memory_space<smem>>
    %124 = vector.broadcast %123 : f32 to vector<16x128xf32>
    %125 = arith.mulf %124, %122 : vector<16x128xf32>
    %126 = arith.addf %120, %125 : vector<16x128xf32>
    %c22 = arith.constant 22 : index
    %127 = memref.load %arg2[%c22] : memref<98xf32, #tpu.memory_space<smem>>
    %c127_i32_42 = arith.constant 127 : i32
    %128 = tpu.dynamic_rotate %122 by %c127_i32_42 dim 1 : vector<16x128xf32>, i32 -> vector<16x128xf32>
    %129 = vector.broadcast %127 : f32 to vector<16x128xf32>
    %130 = arith.mulf %129, %128 : vector<16x128xf32>
    %131 = arith.addf %126, %130 : vector<16x128xf32>
    %c23 = arith.constant 23 : index
    %132 = memref.load %arg2[%c23] : memref<98xf32, #tpu.memory_space<smem>>
    %c126_i32_43 = arith.constant 126 : i32
    %133 = tpu.dynamic_rotate %122 by %c126_i32_43 dim 1 : vector<16x128xf32>, i32 -> vector<16x128xf32>
    %134 = vector.broadcast %132 : f32 to vector<16x128xf32>
    %135 = arith.mulf %134, %133 : vector<16x128xf32>
    %136 = arith.addf %131, %135 : vector<16x128xf32>
    %c24 = arith.constant 24 : index
    %137 = memref.load %arg2[%c24] : memref<98xf32, #tpu.memory_space<smem>>
    %c125_i32_44 = arith.constant 125 : i32
    %138 = tpu.dynamic_rotate %122 by %c125_i32_44 dim 1 : vector<16x128xf32>, i32 -> vector<16x128xf32>
    %139 = vector.broadcast %137 : f32 to vector<16x128xf32>
    %140 = arith.mulf %139, %138 : vector<16x128xf32>
    %141 = arith.addf %136, %140 : vector<16x128xf32>
    %c25 = arith.constant 25 : index
    %142 = memref.load %arg2[%c25] : memref<98xf32, #tpu.memory_space<smem>>
    %c124_i32_45 = arith.constant 124 : i32
    %143 = tpu.dynamic_rotate %122 by %c124_i32_45 dim 1 : vector<16x128xf32>, i32 -> vector<16x128xf32>
    %144 = vector.broadcast %142 : f32 to vector<16x128xf32>
    %145 = arith.mulf %144, %143 : vector<16x128xf32>
    %146 = arith.addf %141, %145 : vector<16x128xf32>
    %c26 = arith.constant 26 : index
    %147 = memref.load %arg2[%c26] : memref<98xf32, #tpu.memory_space<smem>>
    %c123_i32_46 = arith.constant 123 : i32
    %148 = tpu.dynamic_rotate %122 by %c123_i32_46 dim 1 : vector<16x128xf32>, i32 -> vector<16x128xf32>
    %149 = vector.broadcast %147 : f32 to vector<16x128xf32>
    %150 = arith.mulf %149, %148 : vector<16x128xf32>
    %151 = arith.addf %146, %150 : vector<16x128xf32>
    %c27 = arith.constant 27 : index
    %152 = memref.load %arg2[%c27] : memref<98xf32, #tpu.memory_space<smem>>
    %c122_i32_47 = arith.constant 122 : i32
    %153 = tpu.dynamic_rotate %122 by %c122_i32_47 dim 1 : vector<16x128xf32>, i32 -> vector<16x128xf32>
    %154 = vector.broadcast %152 : f32 to vector<16x128xf32>
    %155 = arith.mulf %154, %153 : vector<16x128xf32>
    %156 = arith.addf %151, %155 : vector<16x128xf32>
    %c0_48 = arith.constant 0 : index
    %c4_49 = arith.constant 4 : index
    %c0_50 = arith.constant 0 : index
    %157 = vector.load %arg4[%c0_48, %c4_49, %c0_50] : memref<2x22x128xf32, #tpu.memory_space<vmem>>, vector<1x16x128xf32>
    %158 = vector.shape_cast %157 : vector<1x16x128xf32> to vector<16x128xf32>
    %c28 = arith.constant 28 : index
    %159 = memref.load %arg2[%c28] : memref<98xf32, #tpu.memory_space<smem>>
    %160 = vector.broadcast %159 : f32 to vector<16x128xf32>
    %161 = arith.mulf %160, %158 : vector<16x128xf32>
    %162 = arith.addf %156, %161 : vector<16x128xf32>
    %c29 = arith.constant 29 : index
    %163 = memref.load %arg2[%c29] : memref<98xf32, #tpu.memory_space<smem>>
    %c127_i32_51 = arith.constant 127 : i32
    %164 = tpu.dynamic_rotate %158 by %c127_i32_51 dim 1 : vector<16x128xf32>, i32 -> vector<16x128xf32>
    %165 = vector.broadcast %163 : f32 to vector<16x128xf32>
    %166 = arith.mulf %165, %164 : vector<16x128xf32>
    %167 = arith.addf %162, %166 : vector<16x128xf32>
    %c30 = arith.constant 30 : index
    %168 = memref.load %arg2[%c30] : memref<98xf32, #tpu.memory_space<smem>>
    %c126_i32_52 = arith.constant 126 : i32
    %169 = tpu.dynamic_rotate %158 by %c126_i32_52 dim 1 : vector<16x128xf32>, i32 -> vector<16x128xf32>
    %170 = vector.broadcast %168 : f32 to vector<16x128xf32>
    %171 = arith.mulf %170, %169 : vector<16x128xf32>
    %172 = arith.addf %167, %171 : vector<16x128xf32>
    %c31 = arith.constant 31 : index
    %173 = memref.load %arg2[%c31] : memref<98xf32, #tpu.memory_space<smem>>
    %c125_i32_53 = arith.constant 125 : i32
    %174 = tpu.dynamic_rotate %158 by %c125_i32_53 dim 1 : vector<16x128xf32>, i32 -> vector<16x128xf32>
    %175 = vector.broadcast %173 : f32 to vector<16x128xf32>
    %176 = arith.mulf %175, %174 : vector<16x128xf32>
    %177 = arith.addf %172, %176 : vector<16x128xf32>
    %c32 = arith.constant 32 : index
    %178 = memref.load %arg2[%c32] : memref<98xf32, #tpu.memory_space<smem>>
    %c124_i32_54 = arith.constant 124 : i32
    %179 = tpu.dynamic_rotate %158 by %c124_i32_54 dim 1 : vector<16x128xf32>, i32 -> vector<16x128xf32>
    %180 = vector.broadcast %178 : f32 to vector<16x128xf32>
    %181 = arith.mulf %180, %179 : vector<16x128xf32>
    %182 = arith.addf %177, %181 : vector<16x128xf32>
    %c33 = arith.constant 33 : index
    %183 = memref.load %arg2[%c33] : memref<98xf32, #tpu.memory_space<smem>>
    %c123_i32_55 = arith.constant 123 : i32
    %184 = tpu.dynamic_rotate %158 by %c123_i32_55 dim 1 : vector<16x128xf32>, i32 -> vector<16x128xf32>
    %185 = vector.broadcast %183 : f32 to vector<16x128xf32>
    %186 = arith.mulf %185, %184 : vector<16x128xf32>
    %187 = arith.addf %182, %186 : vector<16x128xf32>
    %c34 = arith.constant 34 : index
    %188 = memref.load %arg2[%c34] : memref<98xf32, #tpu.memory_space<smem>>
    %c122_i32_56 = arith.constant 122 : i32
    %189 = tpu.dynamic_rotate %158 by %c122_i32_56 dim 1 : vector<16x128xf32>, i32 -> vector<16x128xf32>
    %190 = vector.broadcast %188 : f32 to vector<16x128xf32>
    %191 = arith.mulf %190, %189 : vector<16x128xf32>
    %192 = arith.addf %187, %191 : vector<16x128xf32>
    %c0_57 = arith.constant 0 : index
    %c5_58 = arith.constant 5 : index
    %c0_59 = arith.constant 0 : index
    %193 = vector.load %arg4[%c0_57, %c5_58, %c0_59] : memref<2x22x128xf32, #tpu.memory_space<vmem>>, vector<1x16x128xf32>
    %194 = vector.shape_cast %193 : vector<1x16x128xf32> to vector<16x128xf32>
    %c35 = arith.constant 35 : index
    %195 = memref.load %arg2[%c35] : memref<98xf32, #tpu.memory_space<smem>>
    %196 = vector.broadcast %195 : f32 to vector<16x128xf32>
    %197 = arith.mulf %196, %194 : vector<16x128xf32>
    %198 = arith.addf %192, %197 : vector<16x128xf32>
    %c36 = arith.constant 36 : index
    %199 = memref.load %arg2[%c36] : memref<98xf32, #tpu.memory_space<smem>>
    %c127_i32_60 = arith.constant 127 : i32
    %200 = tpu.dynamic_rotate %194 by %c127_i32_60 dim 1 : vector<16x128xf32>, i32 -> vector<16x128xf32>
    %201 = vector.broadcast %199 : f32 to vector<16x128xf32>
    %202 = arith.mulf %201, %200 : vector<16x128xf32>
    %203 = arith.addf %198, %202 : vector<16x128xf32>
    %c37 = arith.constant 37 : index
    %204 = memref.load %arg2[%c37] : memref<98xf32, #tpu.memory_space<smem>>
    %c126_i32_61 = arith.constant 126 : i32
    %205 = tpu.dynamic_rotate %194 by %c126_i32_61 dim 1 : vector<16x128xf32>, i32 -> vector<16x128xf32>
    %206 = vector.broadcast %204 : f32 to vector<16x128xf32>
    %207 = arith.mulf %206, %205 : vector<16x128xf32>
    %208 = arith.addf %203, %207 : vector<16x128xf32>
    %c38 = arith.constant 38 : index
    %209 = memref.load %arg2[%c38] : memref<98xf32, #tpu.memory_space<smem>>
    %c125_i32_62 = arith.constant 125 : i32
    %210 = tpu.dynamic_rotate %194 by %c125_i32_62 dim 1 : vector<16x128xf32>, i32 -> vector<16x128xf32>
    %211 = vector.broadcast %209 : f32 to vector<16x128xf32>
    %212 = arith.mulf %211, %210 : vector<16x128xf32>
    %213 = arith.addf %208, %212 : vector<16x128xf32>
    %c39 = arith.constant 39 : index
    %214 = memref.load %arg2[%c39] : memref<98xf32, #tpu.memory_space<smem>>
    %c124_i32_63 = arith.constant 124 : i32
    %215 = tpu.dynamic_rotate %194 by %c124_i32_63 dim 1 : vector<16x128xf32>, i32 -> vector<16x128xf32>
    %216 = vector.broadcast %214 : f32 to vector<16x128xf32>
    %217 = arith.mulf %216, %215 : vector<16x128xf32>
    %218 = arith.addf %213, %217 : vector<16x128xf32>
    %c40 = arith.constant 40 : index
    %219 = memref.load %arg2[%c40] : memref<98xf32, #tpu.memory_space<smem>>
    %c123_i32_64 = arith.constant 123 : i32
    %220 = tpu.dynamic_rotate %194 by %c123_i32_64 dim 1 : vector<16x128xf32>, i32 -> vector<16x128xf32>
    %221 = vector.broadcast %219 : f32 to vector<16x128xf32>
    %222 = arith.mulf %221, %220 : vector<16x128xf32>
    %223 = arith.addf %218, %222 : vector<16x128xf32>
    %c41 = arith.constant 41 : index
    %224 = memref.load %arg2[%c41] : memref<98xf32, #tpu.memory_space<smem>>
    %c122_i32_65 = arith.constant 122 : i32
    %225 = tpu.dynamic_rotate %194 by %c122_i32_65 dim 1 : vector<16x128xf32>, i32 -> vector<16x128xf32>
    %226 = vector.broadcast %224 : f32 to vector<16x128xf32>
    %227 = arith.mulf %226, %225 : vector<16x128xf32>
    %228 = arith.addf %223, %227 : vector<16x128xf32>
    %c0_66 = arith.constant 0 : index
    %c6_67 = arith.constant 6 : index
    %c0_68 = arith.constant 0 : index
    %229 = vector.load %arg4[%c0_66, %c6_67, %c0_68] : memref<2x22x128xf32, #tpu.memory_space<vmem>>, vector<1x16x128xf32>
    %230 = vector.shape_cast %229 : vector<1x16x128xf32> to vector<16x128xf32>
    %c42 = arith.constant 42 : index
    %231 = memref.load %arg2[%c42] : memref<98xf32, #tpu.memory_space<smem>>
    %232 = vector.broadcast %231 : f32 to vector<16x128xf32>
    %233 = arith.mulf %232, %230 : vector<16x128xf32>
    %234 = arith.addf %228, %233 : vector<16x128xf32>
    %c43 = arith.constant 43 : index
    %235 = memref.load %arg2[%c43] : memref<98xf32, #tpu.memory_space<smem>>
    %c127_i32_69 = arith.constant 127 : i32
    %236 = tpu.dynamic_rotate %230 by %c127_i32_69 dim 1 : vector<16x128xf32>, i32 -> vector<16x128xf32>
    %237 = vector.broadcast %235 : f32 to vector<16x128xf32>
    %238 = arith.mulf %237, %236 : vector<16x128xf32>
    %239 = arith.addf %234, %238 : vector<16x128xf32>
    %c44 = arith.constant 44 : index
    %240 = memref.load %arg2[%c44] : memref<98xf32, #tpu.memory_space<smem>>
    %c126_i32_70 = arith.constant 126 : i32
    %241 = tpu.dynamic_rotate %230 by %c126_i32_70 dim 1 : vector<16x128xf32>, i32 -> vector<16x128xf32>
    %242 = vector.broadcast %240 : f32 to vector<16x128xf32>
    %243 = arith.mulf %242, %241 : vector<16x128xf32>
    %244 = arith.addf %239, %243 : vector<16x128xf32>
    %c45 = arith.constant 45 : index
    %245 = memref.load %arg2[%c45] : memref<98xf32, #tpu.memory_space<smem>>
    %c125_i32_71 = arith.constant 125 : i32
    %246 = tpu.dynamic_rotate %230 by %c125_i32_71 dim 1 : vector<16x128xf32>, i32 -> vector<16x128xf32>
    %247 = vector.broadcast %245 : f32 to vector<16x128xf32>
    %248 = arith.mulf %247, %246 : vector<16x128xf32>
    %249 = arith.addf %244, %248 : vector<16x128xf32>
    %c46 = arith.constant 46 : index
    %250 = memref.load %arg2[%c46] : memref<98xf32, #tpu.memory_space<smem>>
    %c124_i32_72 = arith.constant 124 : i32
    %251 = tpu.dynamic_rotate %230 by %c124_i32_72 dim 1 : vector<16x128xf32>, i32 -> vector<16x128xf32>
    %252 = vector.broadcast %250 : f32 to vector<16x128xf32>
    %253 = arith.mulf %252, %251 : vector<16x128xf32>
    %254 = arith.addf %249, %253 : vector<16x128xf32>
    %c47 = arith.constant 47 : index
    %255 = memref.load %arg2[%c47] : memref<98xf32, #tpu.memory_space<smem>>
    %c123_i32_73 = arith.constant 123 : i32
    %256 = tpu.dynamic_rotate %230 by %c123_i32_73 dim 1 : vector<16x128xf32>, i32 -> vector<16x128xf32>
    %257 = vector.broadcast %255 : f32 to vector<16x128xf32>
    %258 = arith.mulf %257, %256 : vector<16x128xf32>
    %259 = arith.addf %254, %258 : vector<16x128xf32>
    %c48 = arith.constant 48 : index
    %260 = memref.load %arg2[%c48] : memref<98xf32, #tpu.memory_space<smem>>
    %c122_i32_74 = arith.constant 122 : i32
    %261 = tpu.dynamic_rotate %230 by %c122_i32_74 dim 1 : vector<16x128xf32>, i32 -> vector<16x128xf32>
    %262 = vector.broadcast %260 : f32 to vector<16x128xf32>
    %263 = arith.mulf %262, %261 : vector<16x128xf32>
    %264 = arith.addf %259, %263 : vector<16x128xf32>
    %c1_75 = arith.constant 1 : index
    %c0_76 = arith.constant 0 : index
    %c0_77 = arith.constant 0 : index
    %265 = vector.load %arg4[%c1_75, %c0_76, %c0_77] : memref<2x22x128xf32, #tpu.memory_space<vmem>>, vector<1x16x128xf32>
    %266 = vector.shape_cast %265 : vector<1x16x128xf32> to vector<16x128xf32>
    %c49 = arith.constant 49 : index
    %267 = memref.load %arg2[%c49] : memref<98xf32, #tpu.memory_space<smem>>
    %268 = vector.broadcast %267 : f32 to vector<16x128xf32>
    %269 = arith.mulf %268, %266 : vector<16x128xf32>
    %270 = arith.addf %264, %269 : vector<16x128xf32>
    %c50 = arith.constant 50 : index
    %271 = memref.load %arg2[%c50] : memref<98xf32, #tpu.memory_space<smem>>
    %c127_i32_78 = arith.constant 127 : i32
    %272 = tpu.dynamic_rotate %266 by %c127_i32_78 dim 1 : vector<16x128xf32>, i32 -> vector<16x128xf32>
    %273 = vector.broadcast %271 : f32 to vector<16x128xf32>
    %274 = arith.mulf %273, %272 : vector<16x128xf32>
    %275 = arith.addf %270, %274 : vector<16x128xf32>
    %c51 = arith.constant 51 : index
    %276 = memref.load %arg2[%c51] : memref<98xf32, #tpu.memory_space<smem>>
    %c126_i32_79 = arith.constant 126 : i32
    %277 = tpu.dynamic_rotate %266 by %c126_i32_79 dim 1 : vector<16x128xf32>, i32 -> vector<16x128xf32>
    %278 = vector.broadcast %276 : f32 to vector<16x128xf32>
    %279 = arith.mulf %278, %277 : vector<16x128xf32>
    %280 = arith.addf %275, %279 : vector<16x128xf32>
    %c52 = arith.constant 52 : index
    %281 = memref.load %arg2[%c52] : memref<98xf32, #tpu.memory_space<smem>>
    %c125_i32_80 = arith.constant 125 : i32
    %282 = tpu.dynamic_rotate %266 by %c125_i32_80 dim 1 : vector<16x128xf32>, i32 -> vector<16x128xf32>
    %283 = vector.broadcast %281 : f32 to vector<16x128xf32>
    %284 = arith.mulf %283, %282 : vector<16x128xf32>
    %285 = arith.addf %280, %284 : vector<16x128xf32>
    %c53 = arith.constant 53 : index
    %286 = memref.load %arg2[%c53] : memref<98xf32, #tpu.memory_space<smem>>
    %c124_i32_81 = arith.constant 124 : i32
    %287 = tpu.dynamic_rotate %266 by %c124_i32_81 dim 1 : vector<16x128xf32>, i32 -> vector<16x128xf32>
    %288 = vector.broadcast %286 : f32 to vector<16x128xf32>
    %289 = arith.mulf %288, %287 : vector<16x128xf32>
    %290 = arith.addf %285, %289 : vector<16x128xf32>
    %c54 = arith.constant 54 : index
    %291 = memref.load %arg2[%c54] : memref<98xf32, #tpu.memory_space<smem>>
    %c123_i32_82 = arith.constant 123 : i32
    %292 = tpu.dynamic_rotate %266 by %c123_i32_82 dim 1 : vector<16x128xf32>, i32 -> vector<16x128xf32>
    %293 = vector.broadcast %291 : f32 to vector<16x128xf32>
    %294 = arith.mulf %293, %292 : vector<16x128xf32>
    %295 = arith.addf %290, %294 : vector<16x128xf32>
    %c55 = arith.constant 55 : index
    %296 = memref.load %arg2[%c55] : memref<98xf32, #tpu.memory_space<smem>>
    %c122_i32_83 = arith.constant 122 : i32
    %297 = tpu.dynamic_rotate %266 by %c122_i32_83 dim 1 : vector<16x128xf32>, i32 -> vector<16x128xf32>
    %298 = vector.broadcast %296 : f32 to vector<16x128xf32>
    %299 = arith.mulf %298, %297 : vector<16x128xf32>
    %300 = arith.addf %295, %299 : vector<16x128xf32>
    %c1_84 = arith.constant 1 : index
    %c1_85 = arith.constant 1 : index
    %c0_86 = arith.constant 0 : index
    %301 = vector.load %arg4[%c1_84, %c1_85, %c0_86] : memref<2x22x128xf32, #tpu.memory_space<vmem>>, vector<1x16x128xf32>
    %302 = vector.shape_cast %301 : vector<1x16x128xf32> to vector<16x128xf32>
    %c56 = arith.constant 56 : index
    %303 = memref.load %arg2[%c56] : memref<98xf32, #tpu.memory_space<smem>>
    %304 = vector.broadcast %303 : f32 to vector<16x128xf32>
    %305 = arith.mulf %304, %302 : vector<16x128xf32>
    %306 = arith.addf %300, %305 : vector<16x128xf32>
    %c57 = arith.constant 57 : index
    %307 = memref.load %arg2[%c57] : memref<98xf32, #tpu.memory_space<smem>>
    %c127_i32_87 = arith.constant 127 : i32
    %308 = tpu.dynamic_rotate %302 by %c127_i32_87 dim 1 : vector<16x128xf32>, i32 -> vector<16x128xf32>
    %309 = vector.broadcast %307 : f32 to vector<16x128xf32>
    %310 = arith.mulf %309, %308 : vector<16x128xf32>
    %311 = arith.addf %306, %310 : vector<16x128xf32>
    %c58 = arith.constant 58 : index
    %312 = memref.load %arg2[%c58] : memref<98xf32, #tpu.memory_space<smem>>
    %c126_i32_88 = arith.constant 126 : i32
    %313 = tpu.dynamic_rotate %302 by %c126_i32_88 dim 1 : vector<16x128xf32>, i32 -> vector<16x128xf32>
    %314 = vector.broadcast %312 : f32 to vector<16x128xf32>
    %315 = arith.mulf %314, %313 : vector<16x128xf32>
    %316 = arith.addf %311, %315 : vector<16x128xf32>
    %c59 = arith.constant 59 : index
    %317 = memref.load %arg2[%c59] : memref<98xf32, #tpu.memory_space<smem>>
    %c125_i32_89 = arith.constant 125 : i32
    %318 = tpu.dynamic_rotate %302 by %c125_i32_89 dim 1 : vector<16x128xf32>, i32 -> vector<16x128xf32>
    %319 = vector.broadcast %317 : f32 to vector<16x128xf32>
    %320 = arith.mulf %319, %318 : vector<16x128xf32>
    %321 = arith.addf %316, %320 : vector<16x128xf32>
    %c60 = arith.constant 60 : index
    %322 = memref.load %arg2[%c60] : memref<98xf32, #tpu.memory_space<smem>>
    %c124_i32_90 = arith.constant 124 : i32
    %323 = tpu.dynamic_rotate %302 by %c124_i32_90 dim 1 : vector<16x128xf32>, i32 -> vector<16x128xf32>
    %324 = vector.broadcast %322 : f32 to vector<16x128xf32>
    %325 = arith.mulf %324, %323 : vector<16x128xf32>
    %326 = arith.addf %321, %325 : vector<16x128xf32>
    %c61 = arith.constant 61 : index
    %327 = memref.load %arg2[%c61] : memref<98xf32, #tpu.memory_space<smem>>
    %c123_i32_91 = arith.constant 123 : i32
    %328 = tpu.dynamic_rotate %302 by %c123_i32_91 dim 1 : vector<16x128xf32>, i32 -> vector<16x128xf32>
    %329 = vector.broadcast %327 : f32 to vector<16x128xf32>
    %330 = arith.mulf %329, %328 : vector<16x128xf32>
    %331 = arith.addf %326, %330 : vector<16x128xf32>
    %c62 = arith.constant 62 : index
    %332 = memref.load %arg2[%c62] : memref<98xf32, #tpu.memory_space<smem>>
    %c122_i32_92 = arith.constant 122 : i32
    %333 = tpu.dynamic_rotate %302 by %c122_i32_92 dim 1 : vector<16x128xf32>, i32 -> vector<16x128xf32>
    %334 = vector.broadcast %332 : f32 to vector<16x128xf32>
    %335 = arith.mulf %334, %333 : vector<16x128xf32>
    %336 = arith.addf %331, %335 : vector<16x128xf32>
    %c1_93 = arith.constant 1 : index
    %c2_94 = arith.constant 2 : index
    %c0_95 = arith.constant 0 : index
    %337 = vector.load %arg4[%c1_93, %c2_94, %c0_95] : memref<2x22x128xf32, #tpu.memory_space<vmem>>, vector<1x16x128xf32>
    %338 = vector.shape_cast %337 : vector<1x16x128xf32> to vector<16x128xf32>
    %c63 = arith.constant 63 : index
    %339 = memref.load %arg2[%c63] : memref<98xf32, #tpu.memory_space<smem>>
    %340 = vector.broadcast %339 : f32 to vector<16x128xf32>
    %341 = arith.mulf %340, %338 : vector<16x128xf32>
    %342 = arith.addf %336, %341 : vector<16x128xf32>
    %c64 = arith.constant 64 : index
    %343 = memref.load %arg2[%c64] : memref<98xf32, #tpu.memory_space<smem>>
    %c127_i32_96 = arith.constant 127 : i32
    %344 = tpu.dynamic_rotate %338 by %c127_i32_96 dim 1 : vector<16x128xf32>, i32 -> vector<16x128xf32>
    %345 = vector.broadcast %343 : f32 to vector<16x128xf32>
    %346 = arith.mulf %345, %344 : vector<16x128xf32>
    %347 = arith.addf %342, %346 : vector<16x128xf32>
    %c65 = arith.constant 65 : index
    %348 = memref.load %arg2[%c65] : memref<98xf32, #tpu.memory_space<smem>>
    %c126_i32_97 = arith.constant 126 : i32
    %349 = tpu.dynamic_rotate %338 by %c126_i32_97 dim 1 : vector<16x128xf32>, i32 -> vector<16x128xf32>
    %350 = vector.broadcast %348 : f32 to vector<16x128xf32>
    %351 = arith.mulf %350, %349 : vector<16x128xf32>
    %352 = arith.addf %347, %351 : vector<16x128xf32>
    %c66 = arith.constant 66 : index
    %353 = memref.load %arg2[%c66] : memref<98xf32, #tpu.memory_space<smem>>
    %c125_i32_98 = arith.constant 125 : i32
    %354 = tpu.dynamic_rotate %338 by %c125_i32_98 dim 1 : vector<16x128xf32>, i32 -> vector<16x128xf32>
    %355 = vector.broadcast %353 : f32 to vector<16x128xf32>
    %356 = arith.mulf %355, %354 : vector<16x128xf32>
    %357 = arith.addf %352, %356 : vector<16x128xf32>
    %c67 = arith.constant 67 : index
    %358 = memref.load %arg2[%c67] : memref<98xf32, #tpu.memory_space<smem>>
    %c124_i32_99 = arith.constant 124 : i32
    %359 = tpu.dynamic_rotate %338 by %c124_i32_99 dim 1 : vector<16x128xf32>, i32 -> vector<16x128xf32>
    %360 = vector.broadcast %358 : f32 to vector<16x128xf32>
    %361 = arith.mulf %360, %359 : vector<16x128xf32>
    %362 = arith.addf %357, %361 : vector<16x128xf32>
    %c68 = arith.constant 68 : index
    %363 = memref.load %arg2[%c68] : memref<98xf32, #tpu.memory_space<smem>>
    %c123_i32_100 = arith.constant 123 : i32
    %364 = tpu.dynamic_rotate %338 by %c123_i32_100 dim 1 : vector<16x128xf32>, i32 -> vector<16x128xf32>
    %365 = vector.broadcast %363 : f32 to vector<16x128xf32>
    %366 = arith.mulf %365, %364 : vector<16x128xf32>
    %367 = arith.addf %362, %366 : vector<16x128xf32>
    %c69 = arith.constant 69 : index
    %368 = memref.load %arg2[%c69] : memref<98xf32, #tpu.memory_space<smem>>
    %c122_i32_101 = arith.constant 122 : i32
    %369 = tpu.dynamic_rotate %338 by %c122_i32_101 dim 1 : vector<16x128xf32>, i32 -> vector<16x128xf32>
    %370 = vector.broadcast %368 : f32 to vector<16x128xf32>
    %371 = arith.mulf %370, %369 : vector<16x128xf32>
    %372 = arith.addf %367, %371 : vector<16x128xf32>
    %c1_102 = arith.constant 1 : index
    %c3_103 = arith.constant 3 : index
    %c0_104 = arith.constant 0 : index
    %373 = vector.load %arg4[%c1_102, %c3_103, %c0_104] : memref<2x22x128xf32, #tpu.memory_space<vmem>>, vector<1x16x128xf32>
    %374 = vector.shape_cast %373 : vector<1x16x128xf32> to vector<16x128xf32>
    %c70 = arith.constant 70 : index
    %375 = memref.load %arg2[%c70] : memref<98xf32, #tpu.memory_space<smem>>
    %376 = vector.broadcast %375 : f32 to vector<16x128xf32>
    %377 = arith.mulf %376, %374 : vector<16x128xf32>
    %378 = arith.addf %372, %377 : vector<16x128xf32>
    %c71 = arith.constant 71 : index
    %379 = memref.load %arg2[%c71] : memref<98xf32, #tpu.memory_space<smem>>
    %c127_i32_105 = arith.constant 127 : i32
    %380 = tpu.dynamic_rotate %374 by %c127_i32_105 dim 1 : vector<16x128xf32>, i32 -> vector<16x128xf32>
    %381 = vector.broadcast %379 : f32 to vector<16x128xf32>
    %382 = arith.mulf %381, %380 : vector<16x128xf32>
    %383 = arith.addf %378, %382 : vector<16x128xf32>
    %c72 = arith.constant 72 : index
    %384 = memref.load %arg2[%c72] : memref<98xf32, #tpu.memory_space<smem>>
    %c126_i32_106 = arith.constant 126 : i32
    %385 = tpu.dynamic_rotate %374 by %c126_i32_106 dim 1 : vector<16x128xf32>, i32 -> vector<16x128xf32>
    %386 = vector.broadcast %384 : f32 to vector<16x128xf32>
    %387 = arith.mulf %386, %385 : vector<16x128xf32>
    %388 = arith.addf %383, %387 : vector<16x128xf32>
    %c73 = arith.constant 73 : index
    %389 = memref.load %arg2[%c73] : memref<98xf32, #tpu.memory_space<smem>>
    %c125_i32_107 = arith.constant 125 : i32
    %390 = tpu.dynamic_rotate %374 by %c125_i32_107 dim 1 : vector<16x128xf32>, i32 -> vector<16x128xf32>
    %391 = vector.broadcast %389 : f32 to vector<16x128xf32>
    %392 = arith.mulf %391, %390 : vector<16x128xf32>
    %393 = arith.addf %388, %392 : vector<16x128xf32>
    %c74 = arith.constant 74 : index
    %394 = memref.load %arg2[%c74] : memref<98xf32, #tpu.memory_space<smem>>
    %c124_i32_108 = arith.constant 124 : i32
    %395 = tpu.dynamic_rotate %374 by %c124_i32_108 dim 1 : vector<16x128xf32>, i32 -> vector<16x128xf32>
    %396 = vector.broadcast %394 : f32 to vector<16x128xf32>
    %397 = arith.mulf %396, %395 : vector<16x128xf32>
    %398 = arith.addf %393, %397 : vector<16x128xf32>
    %c75 = arith.constant 75 : index
    %399 = memref.load %arg2[%c75] : memref<98xf32, #tpu.memory_space<smem>>
    %c123_i32_109 = arith.constant 123 : i32
    %400 = tpu.dynamic_rotate %374 by %c123_i32_109 dim 1 : vector<16x128xf32>, i32 -> vector<16x128xf32>
    %401 = vector.broadcast %399 : f32 to vector<16x128xf32>
    %402 = arith.mulf %401, %400 : vector<16x128xf32>
    %403 = arith.addf %398, %402 : vector<16x128xf32>
    %c76 = arith.constant 76 : index
    %404 = memref.load %arg2[%c76] : memref<98xf32, #tpu.memory_space<smem>>
    %c122_i32_110 = arith.constant 122 : i32
    %405 = tpu.dynamic_rotate %374 by %c122_i32_110 dim 1 : vector<16x128xf32>, i32 -> vector<16x128xf32>
    %406 = vector.broadcast %404 : f32 to vector<16x128xf32>
    %407 = arith.mulf %406, %405 : vector<16x128xf32>
    %408 = arith.addf %403, %407 : vector<16x128xf32>
    %c1_111 = arith.constant 1 : index
    %c4_112 = arith.constant 4 : index
    %c0_113 = arith.constant 0 : index
    %409 = vector.load %arg4[%c1_111, %c4_112, %c0_113] : memref<2x22x128xf32, #tpu.memory_space<vmem>>, vector<1x16x128xf32>
    %410 = vector.shape_cast %409 : vector<1x16x128xf32> to vector<16x128xf32>
    %c77 = arith.constant 77 : index
    %411 = memref.load %arg2[%c77] : memref<98xf32, #tpu.memory_space<smem>>
    %412 = vector.broadcast %411 : f32 to vector<16x128xf32>
    %413 = arith.mulf %412, %410 : vector<16x128xf32>
    %414 = arith.addf %408, %413 : vector<16x128xf32>
    %c78 = arith.constant 78 : index
    %415 = memref.load %arg2[%c78] : memref<98xf32, #tpu.memory_space<smem>>
    %c127_i32_114 = arith.constant 127 : i32
    %416 = tpu.dynamic_rotate %410 by %c127_i32_114 dim 1 : vector<16x128xf32>, i32 -> vector<16x128xf32>
    %417 = vector.broadcast %415 : f32 to vector<16x128xf32>
    %418 = arith.mulf %417, %416 : vector<16x128xf32>
    %419 = arith.addf %414, %418 : vector<16x128xf32>
    %c79 = arith.constant 79 : index
    %420 = memref.load %arg2[%c79] : memref<98xf32, #tpu.memory_space<smem>>
    %c126_i32_115 = arith.constant 126 : i32
    %421 = tpu.dynamic_rotate %410 by %c126_i32_115 dim 1 : vector<16x128xf32>, i32 -> vector<16x128xf32>
    %422 = vector.broadcast %420 : f32 to vector<16x128xf32>
    %423 = arith.mulf %422, %421 : vector<16x128xf32>
    %424 = arith.addf %419, %423 : vector<16x128xf32>
    %c80 = arith.constant 80 : index
    %425 = memref.load %arg2[%c80] : memref<98xf32, #tpu.memory_space<smem>>
    %c125_i32_116 = arith.constant 125 : i32
    %426 = tpu.dynamic_rotate %410 by %c125_i32_116 dim 1 : vector<16x128xf32>, i32 -> vector<16x128xf32>
    %427 = vector.broadcast %425 : f32 to vector<16x128xf32>
    %428 = arith.mulf %427, %426 : vector<16x128xf32>
    %429 = arith.addf %424, %428 : vector<16x128xf32>
    %c81 = arith.constant 81 : index
    %430 = memref.load %arg2[%c81] : memref<98xf32, #tpu.memory_space<smem>>
    %c124_i32_117 = arith.constant 124 : i32
    %431 = tpu.dynamic_rotate %410 by %c124_i32_117 dim 1 : vector<16x128xf32>, i32 -> vector<16x128xf32>
    %432 = vector.broadcast %430 : f32 to vector<16x128xf32>
    %433 = arith.mulf %432, %431 : vector<16x128xf32>
    %434 = arith.addf %429, %433 : vector<16x128xf32>
    %c82 = arith.constant 82 : index
    %435 = memref.load %arg2[%c82] : memref<98xf32, #tpu.memory_space<smem>>
    %c123_i32_118 = arith.constant 123 : i32
    %436 = tpu.dynamic_rotate %410 by %c123_i32_118 dim 1 : vector<16x128xf32>, i32 -> vector<16x128xf32>
    %437 = vector.broadcast %435 : f32 to vector<16x128xf32>
    %438 = arith.mulf %437, %436 : vector<16x128xf32>
    %439 = arith.addf %434, %438 : vector<16x128xf32>
    %c83 = arith.constant 83 : index
    %440 = memref.load %arg2[%c83] : memref<98xf32, #tpu.memory_space<smem>>
    %c122_i32_119 = arith.constant 122 : i32
    %441 = tpu.dynamic_rotate %410 by %c122_i32_119 dim 1 : vector<16x128xf32>, i32 -> vector<16x128xf32>
    %442 = vector.broadcast %440 : f32 to vector<16x128xf32>
    %443 = arith.mulf %442, %441 : vector<16x128xf32>
    %444 = arith.addf %439, %443 : vector<16x128xf32>
    %c1_120 = arith.constant 1 : index
    %c5_121 = arith.constant 5 : index
    %c0_122 = arith.constant 0 : index
    %445 = vector.load %arg4[%c1_120, %c5_121, %c0_122] : memref<2x22x128xf32, #tpu.memory_space<vmem>>, vector<1x16x128xf32>
    %446 = vector.shape_cast %445 : vector<1x16x128xf32> to vector<16x128xf32>
    %c84 = arith.constant 84 : index
    %447 = memref.load %arg2[%c84] : memref<98xf32, #tpu.memory_space<smem>>
    %448 = vector.broadcast %447 : f32 to vector<16x128xf32>
    %449 = arith.mulf %448, %446 : vector<16x128xf32>
    %450 = arith.addf %444, %449 : vector<16x128xf32>
    %c85 = arith.constant 85 : index
    %451 = memref.load %arg2[%c85] : memref<98xf32, #tpu.memory_space<smem>>
    %c127_i32_123 = arith.constant 127 : i32
    %452 = tpu.dynamic_rotate %446 by %c127_i32_123 dim 1 : vector<16x128xf32>, i32 -> vector<16x128xf32>
    %453 = vector.broadcast %451 : f32 to vector<16x128xf32>
    %454 = arith.mulf %453, %452 : vector<16x128xf32>
    %455 = arith.addf %450, %454 : vector<16x128xf32>
    %c86 = arith.constant 86 : index
    %456 = memref.load %arg2[%c86] : memref<98xf32, #tpu.memory_space<smem>>
    %c126_i32_124 = arith.constant 126 : i32
    %457 = tpu.dynamic_rotate %446 by %c126_i32_124 dim 1 : vector<16x128xf32>, i32 -> vector<16x128xf32>
    %458 = vector.broadcast %456 : f32 to vector<16x128xf32>
    %459 = arith.mulf %458, %457 : vector<16x128xf32>
    %460 = arith.addf %455, %459 : vector<16x128xf32>
    %c87 = arith.constant 87 : index
    %461 = memref.load %arg2[%c87] : memref<98xf32, #tpu.memory_space<smem>>
    %c125_i32_125 = arith.constant 125 : i32
    %462 = tpu.dynamic_rotate %446 by %c125_i32_125 dim 1 : vector<16x128xf32>, i32 -> vector<16x128xf32>
    %463 = vector.broadcast %461 : f32 to vector<16x128xf32>
    %464 = arith.mulf %463, %462 : vector<16x128xf32>
    %465 = arith.addf %460, %464 : vector<16x128xf32>
    %c88 = arith.constant 88 : index
    %466 = memref.load %arg2[%c88] : memref<98xf32, #tpu.memory_space<smem>>
    %c124_i32_126 = arith.constant 124 : i32
    %467 = tpu.dynamic_rotate %446 by %c124_i32_126 dim 1 : vector<16x128xf32>, i32 -> vector<16x128xf32>
    %468 = vector.broadcast %466 : f32 to vector<16x128xf32>
    %469 = arith.mulf %468, %467 : vector<16x128xf32>
    %470 = arith.addf %465, %469 : vector<16x128xf32>
    %c89 = arith.constant 89 : index
    %471 = memref.load %arg2[%c89] : memref<98xf32, #tpu.memory_space<smem>>
    %c123_i32_127 = arith.constant 123 : i32
    %472 = tpu.dynamic_rotate %446 by %c123_i32_127 dim 1 : vector<16x128xf32>, i32 -> vector<16x128xf32>
    %473 = vector.broadcast %471 : f32 to vector<16x128xf32>
    %474 = arith.mulf %473, %472 : vector<16x128xf32>
    %475 = arith.addf %470, %474 : vector<16x128xf32>
    %c90 = arith.constant 90 : index
    %476 = memref.load %arg2[%c90] : memref<98xf32, #tpu.memory_space<smem>>
    %c122_i32_128 = arith.constant 122 : i32
    %477 = tpu.dynamic_rotate %446 by %c122_i32_128 dim 1 : vector<16x128xf32>, i32 -> vector<16x128xf32>
    %478 = vector.broadcast %476 : f32 to vector<16x128xf32>
    %479 = arith.mulf %478, %477 : vector<16x128xf32>
    %480 = arith.addf %475, %479 : vector<16x128xf32>
    %c1_129 = arith.constant 1 : index
    %c6_130 = arith.constant 6 : index
    %c0_131 = arith.constant 0 : index
    %481 = vector.load %arg4[%c1_129, %c6_130, %c0_131] : memref<2x22x128xf32, #tpu.memory_space<vmem>>, vector<1x16x128xf32>
    %482 = vector.shape_cast %481 : vector<1x16x128xf32> to vector<16x128xf32>
    %c91 = arith.constant 91 : index
    %483 = memref.load %arg2[%c91] : memref<98xf32, #tpu.memory_space<smem>>
    %484 = vector.broadcast %483 : f32 to vector<16x128xf32>
    %485 = arith.mulf %484, %482 : vector<16x128xf32>
    %486 = arith.addf %480, %485 : vector<16x128xf32>
    %c92 = arith.constant 92 : index
    %487 = memref.load %arg2[%c92] : memref<98xf32, #tpu.memory_space<smem>>
    %c127_i32_132 = arith.constant 127 : i32
    %488 = tpu.dynamic_rotate %482 by %c127_i32_132 dim 1 : vector<16x128xf32>, i32 -> vector<16x128xf32>
    %489 = vector.broadcast %487 : f32 to vector<16x128xf32>
    %490 = arith.mulf %489, %488 : vector<16x128xf32>
    %491 = arith.addf %486, %490 : vector<16x128xf32>
    %c93 = arith.constant 93 : index
    %492 = memref.load %arg2[%c93] : memref<98xf32, #tpu.memory_space<smem>>
    %c126_i32_133 = arith.constant 126 : i32
    %493 = tpu.dynamic_rotate %482 by %c126_i32_133 dim 1 : vector<16x128xf32>, i32 -> vector<16x128xf32>
    %494 = vector.broadcast %492 : f32 to vector<16x128xf32>
    %495 = arith.mulf %494, %493 : vector<16x128xf32>
    %496 = arith.addf %491, %495 : vector<16x128xf32>
    %c94 = arith.constant 94 : index
    %497 = memref.load %arg2[%c94] : memref<98xf32, #tpu.memory_space<smem>>
    %c125_i32_134 = arith.constant 125 : i32
    %498 = tpu.dynamic_rotate %482 by %c125_i32_134 dim 1 : vector<16x128xf32>, i32 -> vector<16x128xf32>
    %499 = vector.broadcast %497 : f32 to vector<16x128xf32>
    %500 = arith.mulf %499, %498 : vector<16x128xf32>
    %501 = arith.addf %496, %500 : vector<16x128xf32>
    %c95 = arith.constant 95 : index
    %502 = memref.load %arg2[%c95] : memref<98xf32, #tpu.memory_space<smem>>
    %c124_i32_135 = arith.constant 124 : i32
    %503 = tpu.dynamic_rotate %482 by %c124_i32_135 dim 1 : vector<16x128xf32>, i32 -> vector<16x128xf32>
    %504 = vector.broadcast %502 : f32 to vector<16x128xf32>
    %505 = arith.mulf %504, %503 : vector<16x128xf32>
    %506 = arith.addf %501, %505 : vector<16x128xf32>
    %c96 = arith.constant 96 : index
    %507 = memref.load %arg2[%c96] : memref<98xf32, #tpu.memory_space<smem>>
    %c123_i32_136 = arith.constant 123 : i32
    %508 = tpu.dynamic_rotate %482 by %c123_i32_136 dim 1 : vector<16x128xf32>, i32 -> vector<16x128xf32>
    %509 = vector.broadcast %507 : f32 to vector<16x128xf32>
    %510 = arith.mulf %509, %508 : vector<16x128xf32>
    %511 = arith.addf %506, %510 : vector<16x128xf32>
    %c97 = arith.constant 97 : index
    %512 = memref.load %arg2[%c97] : memref<98xf32, #tpu.memory_space<smem>>
    %c122_i32_137 = arith.constant 122 : i32
    %513 = tpu.dynamic_rotate %482 by %c122_i32_137 dim 1 : vector<16x128xf32>, i32 -> vector<16x128xf32>
    %514 = vector.broadcast %512 : f32 to vector<16x128xf32>
    %515 = arith.mulf %514, %513 : vector<16x128xf32>
    %516 = arith.addf %511, %515 : vector<16x128xf32>
    %517 = vector.extract_strided_slice %516 {offsets = [0, 0], sizes = [16, 16], strides = [1, 1]} : vector<16x128xf32> to vector<16x16xf32>
    %cst_138 = arith.constant 0.000000e+00 : f32
    %518 = vector.broadcast %cst_138 : f32 to vector<16x16xf32>
    %519 = arith.subf %518, %517 : vector<16x16xf32>
    %520 = math.exp %519 : vector<16x16xf32>
    %cst_139 = arith.constant 1.000000e+00 : f32
    %521 = vector.broadcast %cst_139 : f32 to vector<16x16xf32>
    %522 = arith.addf %521, %520 : vector<16x16xf32>
    %cst_140 = arith.constant 1.000000e+00 : f32
    %523 = vector.broadcast %cst_140 : f32 to vector<16x16xf32>
    %524 = arith.divf %523, %522 : vector<16x16xf32>
    %c0_141 = arith.constant 0 : index
    %c0_142 = arith.constant 0 : index
    %c0_143 = arith.constant 0 : index
    %525 = vector.load %arg3[%c0_141, %c0_142, %c0_143] : memref<1x16x16xf32, #tpu.memory_space<vmem>>, vector<1x16x16xf32>
    %526 = vector.shape_cast %525 : vector<1x16x16xf32> to vector<16x16xf32>
    %527 = vector.shape_cast %524 : vector<16x16xf32> to vector<1x16x16xf32>
    tpu.vector_store %arg3[%c0_141, %c0_142, %c0_143], %527 {strides = array<i32>} : memref<1x16x16xf32, #tpu.memory_space<vmem>>, vector<1x16x16xf32>,
    return
  }
  func.func @transform_0(%arg0: i32) -> (i32, i32, i32, i32) {
    %c0_i32 = arith.constant 0 : i32
    %c0_i32_0 = arith.constant 0 : i32
    %c0_i32_1 = arith.constant 0 : i32
    %c0_i32_2 = arith.constant 0 : i32
    return %arg0, %c0_i32, %c0_i32_0, %c0_i32_1 : i32, i32, i32, i32
  }
  func.func @transform_1(%arg0: i32) -> i32 {
    %c0_i32 = arith.constant 0 : i32
    %c0_i32_0 = arith.constant 0 : i32
    return %c0_i32 : i32
  }
  func.func @transform_2(%arg0: i32) -> (i32, i32, i32) {
    %c0_i32 = arith.constant 0 : i32
    %c0_i32_0 = arith.constant 0 : i32
    %c0_i32_1 = arith.constant 0 : i32
    return %arg0, %c0_i32, %c0_i32_0 : i32, i32, i32
  }
}

</mosaic_0001>

<llo_original>
// kernel: squeeze.1
$region0: #{squeeze.1}
  %s0 = inlined_call_operand.vmem [shape: f32[1,2,7,7], index: 0, kind: input, shape index: {}]
  %s1 = inlined_call_operand.vmem [shape: f32[98], index: 1, kind: output, shape index: {}]
  $region1: #{squeeze.1} parent=0
    #allocation0 [shape = 'u8[4096]{0}', space=vmem, size = 0x1000, scoped, tag = 'scoped mem for output reshape']
    %v2 = vld [vmem:[%s0] sm:$0x1]
    %vm3 = vcmask 56320
    %4 = vst.msk [vmem:[#allocation0] sm:$0x1] %vm3, %v2
    %s5 = scalar_lea.vmem %s0, 14
    %v6 = vld [vmem:[%s5] sm:$0x1]
    %7 = vrot.lane.b32.xlu0 %v6, 91
    %v8 = vpop.permute.xlu0 %7
    %vm9 = vcmask 802520
    %10 = vst.msk [vmem:[#allocation0] sm:$0x1] %vm9, %v8
    %s11 = scalar_lea.vmem %s0, 13
    %v12 = vld [vmem:[%s11] sm:$0x1]
    %13 = vrot.lane.b32.xlu0 %v12, 84
    %v14 = vpop.permute.xlu0 %13
    %vm15 = vcmask 745120
    %16 = vst.msk [vmem:[#allocation0] sm:$0x1] %vm15, %v14
    %s17 = scalar_lea.vmem %s0, 12
    %v18 = vld [vmem:[%s17] sm:$0x1]
    %19 = vrot.lane.b32.xlu0 %v18, 77
    %v20 = vpop.permute.xlu0 %19
    %vm21 = vcmask 687720
    %22 = vst.msk [vmem:[#allocation0] sm:$0x1] %vm21, %v20
    %s23 = scalar_lea.vmem %s0, 11
    %v24 = vld [vmem:[%s23] sm:$0x1]
    %25 = vrot.lane.b32.xlu0 %v24, 70
    %v26 = vpop.permute.xlu0 %25
    %vm27 = vcmask 630320
    %28 = vst.msk [vmem:[#allocation0] sm:$0x1] %vm27, %v26
    %s29 = scalar_lea.vmem %s0, 10
    %v30 = vld [vmem:[%s29] sm:$0x1]
    %31 = vrot.lane.b32.xlu0 %v30, 63
    %v32 = vpop.permute.xlu0 %31
    %vm33 = vcmask 572920
    %34 = vst.msk [vmem:[#allocation0] sm:$0x1] %vm33, %v32
    %s35 = scalar_lea.vmem %s0, 9
    %v36 = vld [vmem:[%s35] sm:$0x1]
    %37 = vrot.lane.b32.xlu0 %v36, 56
    %v38 = vpop.permute.xlu0 %37
    %vm39 = vcmask 515520
    %40 = vst.msk [vmem:[#allocation0] sm:$0x1] %vm39, %v38
    %s41 = scalar_lea.vmem %s0, 8
    %v42 = vld [vmem:[%s41] sm:$0x1]
    %43 = vrot.lane.b32.xlu0 %v42, 49
    %v44 = vpop.permute.xlu0 %43
    %vm45 = vcmask 458120
    %46 = vst.msk [vmem:[#allocation0] sm:$0x1] %vm45, %v44
    %s47 = scalar_lea.vmem %s0, 6
    %v48 = vld [vmem:[%s47] sm:$0x1]
    %49 = vrot.lane.b32.xlu0 %v48, 42
    %v50 = vpop.permute.xlu0 %49
    %vm51 = vcmask 400720
    %52 = vst.msk [vmem:[#allocation0] sm:$0x1] %vm51, %v50
    %s53 = scalar_lea.vmem %s0, 5
    %v54 = vld [vmem:[%s53] sm:$0x1]
    %55 = vrot.lane.b32.xlu0 %v54, 35
    %v56 = vpop.permute.xlu0 %55
    %vm57 = vcmask 343320
    %58 = vst.msk [vmem:[#allocation0] sm:$0x1] %vm57, %v56
    %s59 = scalar_lea.vmem %s0, 4
    %v60 = vld [vmem:[%s59] sm:$0x1]
    %61 = vrot.lane.b32.xlu0 %v60, 28
    %v62 = vpop.permute.xlu0 %61
    %vm63 = vcmask 285920
    %64 = vst.msk [vmem:[#allocation0] sm:$0x1] %vm63, %v62
    %s65 = scalar_lea.vmem %s0, 3
    %v66 = vld [vmem:[%s65] sm:$0x1]
    %67 = vrot.lane.b32.xlu0 %v66, 21
    %v68 = vpop.permute.xlu0 %67
    %vm69 = vcmask 228520
    %70 = vst.msk [vmem:[#allocation0] sm:$0x1] %vm69, %v68
    %s71 = scalar_lea.vmem %s0, 2
    %v72 = vld [vmem:[%s71] sm:$0x1]
    %73 = vrot.lane.b32.xlu0 %v72, 14
    %v74 = vpop.permute.xlu0 %73
    %vm75 = vcmask 171120
    %76 = vst.msk [vmem:[#allocation0] sm:$0x1] %vm75, %v74
    %s77 = scalar_lea.vmem %s0, 1
    %v78 = vld [vmem:[%s77] sm:$0x1]
    %79 = vrot.lane.b32.xlu0 %v78, 7
    %v80 = vpop.permute.xlu0 %79
    %vm81 = vcmask 113720
    %82 = vst.msk [vmem:[#allocation0] sm:$0x1] %vm81, %v80
    %s84 = ssub.s32 2, 1
    %v85 = vld [vmem:[#allocation0] sm:%s84]
    %s87 = ssub.s32 2, 1
    %88 = vst [vmem:[%s1] sm:%s87] %v85

// kernel: spatial_attention_forward.2
$region0: #{spatial_attention_forward.2}
  #allocation0 [shape = 'u32[]', space=smem, size = 0x4, offset = 0x4, fixed_abs, tag = 'smem constant byte address 0x4 - core index']
  #allocation1 [shape = 'u32[72,128]{1,0:T(1,128)}', space=vmem, size = 0x9000, scoped, tag = 'internal scratch']
  %s0 = inlined_call_operand.vmem [shape: f32[2,4,256], index: 0, kind: input, shape index: {}]
  %s1 = inlined_call_operand.vmem [shape: f32[2,2,256], index: 1, kind: output, shape index: {}]
  %s2 = sld [smem:[#allocation0]]
  $region49: #{spatial_attention_forward.2} parent=0
    _
  %s4 = ssub.s32 1, %s2
  %s5 = scalar_select 0, %s4, %s2
  loop: start=0, step=1, limit=4
  $region2: #{spatial_attention_forward.2} parent=0 // loop_pre_header
    _
  $region3: #{spatial_attention_forward.2} parent=0 // loop_header
    %s7 = sphi 0, %s11
    %p8 = scmp.ge.s32.totalorder %s7, 4
    %s14 = sphi 0, %s33
    %s15 = sphi 0, %s29
    %s16 = sphi 0, %s25
    %s17 = sphi 0, %s14
    %s18 = sphi 0, %s15
    %s19 = sphi 0, %s16
    %s20 = sphi 0, %s17
    %s21 = sphi 0, %s18
    %s22 = sphi 0, %s19
    %s40 = sphi 0, %s42
    %s43 = sphi 0, %s40
    %s44 = sphi 0, %s43
    %s60 = sphi 0, %s44
    %s68 = sphi 0, %s70
    %s71 = sphi 0, %s68
    %s72 = sphi 0, %s71
    %s88 = sphi 0, %s72
  $region4: #{spatial_attention_forward.2} parent=0 // loop_header_branch
    %10 = sbr.rel (%p8) target = $region8
  $region5: #{spatial_attention_forward.2} parent=0 // loop_body
    %s12 = ssub.s32 %s7, 1
    %s13 = ssub.s32 %s7, 2
    %s23 = sadd.s32 1, %s16
    %p24 = scmp.ge.s32.totalorder %s23, 1
    %s25 = scalar_select %p24, 0, %s23
    %s26 = sadd.s32 1, %s15
    %s27 = scalar_select %p24, %s26, %s15
    %p28 = scmp.ge.s32.totalorder %s27, 1
    %s29 = scalar_select %p28, 0, %s27
    %s30 = sadd.s32 1, %s14
    %s31 = scalar_select %p28, %s30, %s14
    %p32 = scmp.ge.s32.totalorder %s31, 2
    %s33 = scalar_select %p32, 0, %s31
    %s34 = ssub.s32 %s14, %s33
    %s35 = ssub.s32 %s16, %s25
    %s36 = sor.u32 %s34, %s35
    %s37 = ssub.s32 %s15, %s29
    %s38 = sor.u32 %s36, %s37
    %p39 = scmp.eq.s32.totalorder %s38, 0
    %s41 = sadd.s32 %s40, 1
    %s42 = scalar_select %p39, %s40, %s41
    %p45 = pneg %p39
    %p46 = scmp.eq.s32.totalorder %s7, 1
    %p47 = por %p45, %p46
    %p48 = scmp.ne.s32.totalorder %s40, %s43
    %p49 = scmp.eq.s32.totalorder %s7, 0
    %p50 = por %p48, %p49
    %p51 = scmp.ne.s32.totalorder %s40, %s43
    %p52 = scmp.eq.s32.totalorder %s12, 1
    %p53 = por %p51, %p52
    %p54 = scmp.ne.s32.totalorder %s43, %s44
    %p55 = scmp.eq.s32.totalorder %s12, 0
    %p56 = por %p54, %p55
    %p57 = scmp.ne.s32.totalorder %s43, %s44
    %p58 = scmp.eq.s32.totalorder %s13, 1
    %p59 = por %p57, %p58
    %p61 = scmp.ne.s32.totalorder %s44, %s60
    %p62 = scmp.eq.s32.totalorder %s13, 0
    %p63 = por %p61, %p62
    %s64 = ssub.s32 %s14, %s33
    %s65 = ssub.s32 %s15, %s29
    %s66 = sor.u32 %s64, %s65
    %p67 = scmp.eq.s32.totalorder %s66, 0
    %s69 = sadd.s32 %s68, 1
    %s70 = scalar_select %p67, %s68, %s69
    %p73 = pneg %p67
    %p74 = scmp.eq.s32.totalorder %s7, 1
    %p75 = por %p73, %p74
    %p76 = scmp.ne.s32.totalorder %s68, %s71
    %p77 = scmp.eq.s32.totalorder %s7, 0
    %p78 = por %p76, %p77
    %p79 = scmp.ne.s32.totalorder %s68, %s71
    %p80 = scmp.eq.s32.totalorder %s12, 1
    %p81 = por %p79, %p80
    %p82 = scmp.ne.s32.totalorder %s71, %s72
    %p83 = scmp.eq.s32.totalorder %s12, 0
    %p84 = por %p82, %p83
    %p85 = scmp.ne.s32.totalorder %s71, %s72
    %p86 = scmp.eq.s32.totalorder %s13, 1
    %p87 = por %p85, %p86
    %p89 = scmp.ne.s32.totalorder %s72, %s88
    %p90 = scmp.eq.s32.totalorder %s13, 0
    %p91 = por %p89, %p90
    %p92 = scmp.le.s32.totalorder 1, %s7
    %p93 = scmp.lt.s32.totalorder %s7, 3
    %p94 = pnand %p92, %p93
    %p95 = pneg %p94
    // Predicated region
    $region9: #{spatial_attention_forward.2} parent=5 // pred_check
      _
    $region10: #{spatial_attention_forward.2} parent=5 // pred_check_branch
      %97 = sbr.rel (%p94) target = $region12
    $region11: #{spatial_attention_forward.2} parent=5 // pred_region
      %s98 = ssub.s32 %s7, 1
    $region12: #{spatial_attention_forward.2} parent=5 // pred_fallthru
      _
    %p99 = scmp.lt.s32.totalorder %s7, 2
    // Predicated region
    $region13: #{spatial_attention_forward.2} parent=5 // pred_check
      %p100 = pneg %p99
    $region14: #{spatial_attention_forward.2} parent=5 // pred_check_branch
      %102 = sbr.rel (%p100) target = $region16
    $region15: #{spatial_attention_forward.2} parent=5 // pred_region
      // Predicated region
      $region17: #{spatial_attention_forward.2} parent=15 // pred_check
        %p103 = pneg %p50
      $region18: #{spatial_attention_forward.2} parent=15 // pred_check_branch
        %105 = sbr.rel (%p103) target = $region20
      $region19: #{spatial_attention_forward.2} parent=15 // pred_region
        %s106 = smul.u32 2, %s15
        %p107 = scmp.lt.s32.totalorder %s14, 1
        %s108 = scalar_select %p107, %s14, 1
        %p109 = scmp.lt.s32.totalorder %s16, 0
        %s110 = scalar_select %p109, %s16, 0
        %p111 = scmp.lt.s32.totalorder %s106, 1
        %s112 = scalar_select %p111, %s106, 1
        %s113 = smul.addr %s110, 2
        %s114 = sadd.s32 %s112, %s113
        %s115 = smul.addr %s108, 2
        %s116 = sadd.s32 %s114, %s115
        %s117 = smul.addr %s116, 4
        %s118 = scalar_lea.vmem %s0, %s117
        %s119 = smul.u32 2, %s15
      $region20: #{spatial_attention_forward.2} parent=15 // pred_fallthru
        _
    $region16: #{spatial_attention_forward.2} parent=5 // pred_fallthru
      _
    %p120 = scmp.le.s32.totalorder 1, %s7
    %p121 = scmp.lt.s32.totalorder %s7, 3
    %p122 = pnand %p120, %p121
    %p123 = pneg %p122
    // Predicated region
    $region21: #{spatial_attention_forward.2} parent=5 // pred_check
      _
    $region22: #{spatial_attention_forward.2} parent=5 // pred_check_branch
      %125 = sbr.rel (%p122) target = $region24
    $region23: #{spatial_attention_forward.2} parent=5 // pred_region
      %s126 = ssub.s32 %s7, 1
      %s127 = smul.u32 2, %s18
      %p128 = scmp.lt.s32.totalorder %s17, 1
      %s129 = scalar_select %p128, %s17, 1
      %p130 = scmp.lt.s32.totalorder %s19, 0
      %s131 = scalar_select %p130, %s19, 0
      %p132 = scmp.lt.s32.totalorder %s127, 1
      %s133 = scalar_select %p132, %s127, 1
      %s134 = smul.addr %s131, 2
      %s135 = sadd.s32 %s133, %s134
      %s136 = smul.addr %s129, 2
      %s137 = sadd.s32 %s135, %s136
      %s138 = smul.addr %s137, 4
      %s139 = scalar_lea.vmem %s0, %s138
      %p140 = pneg %p56
      %p141 = pneg %p53
      %p142 = pneg %p84
      %p143 = pneg %p81
      %s144 = smul.u32 2, %s18
      %p145 = scmp.lt.s32.totalorder %s17, 1
      %s146 = scalar_select %p145, %s17, 1
      %p147 = scmp.lt.s32.totalorder %s144, 1
      %s148 = scalar_select %p147, %s144, 1
      %s149 = smul.addr %s146, 2
      %s150 = sadd.s32 %s148, %s149
      %s151 = smul.addr %s150, 2
      %s152 = scalar_lea.vmem %s1, %s151
      %s153 = smul.u32 2, %s18
      %p154 = scmp.lt.s32.totalorder %s17, 1
      %s155 = scalar_select %p154, %s17, 1
      %p156 = scmp.lt.s32.totalorder %s19, 0
      %s157 = scalar_select %p156, %s19, 0
      %p158 = scmp.lt.s32.totalorder %s153, 1
      %s159 = scalar_select %p158, %s153, 1
      %s160 = smul.addr %s157, 2
      %s161 = sadd.s32 %s159, %s160
      %s162 = smul.addr %s155, 2
      %s163 = sadd.s32 %s161, %s162
      %s164 = smul.addr %s163, 4
      %s165 = scalar_lea.vmem %s0, %s164
      %s166 = smul.u32 2, %s18
      %s167 = smul.u32 2, %s18
      %p168 = scmp.lt.s32.totalorder %s17, 1
      %s169 = scalar_select %p168, %s17, 1
      %p170 = scmp.lt.s32.totalorder %s167, 1
      %s171 = scalar_select %p170, %s167, 1
      %s172 = smul.addr %s169, 2
      %s173 = sadd.s32 %s171, %s172
      %s174 = smul.addr %s173, 2
      %s175 = scalar_lea.vmem %s1, %s174
      %s176 = smul.u32 2, %s18
      %v177 = vld [vmem:[%s165] sm:$0xff]
      %179 = vst [vmem:[#allocation1] ss:$2 sm:$0xff] %v177
      %v180 = vld.sshfl [vmem:[#allocation1] sm:$0xff pattern:$0x75316420]
      %v181 = vld.sshfl [vmem:[#allocation1 + $0x8] sm:$0xff pattern:$0x75316420]
      %vm184 = vcmask 1043456
      %v185 = vsel %vm184, %v180, 0.0
      %v186 = vrot.slane %v185, 4
      %v187 = vadd.f32 %v185, %v186
      %v188 = vrot.slane %v187, 2
      %v189 = vadd.f32 %v187, %v188
      %v190 = vrot.slane %v189, 1
      %v191 = vadd.f32 %v189, %v190
      %v192 = vsel %vm184, %v181, 0.0
      %v193 = vrot.slane %v192, 4
      %v194 = vadd.f32 %v192, %v193
      %v195 = vrot.slane %v194, 2
      %v196 = vadd.f32 %v194, %v195
      %v197 = vrot.slane %v196, 1
      %v198 = vadd.f32 %v196, %v197
      %199 = vst [vmem:[#allocation1] ss:$2 sm:$0xff] %v177
      %v200 = vld.sshfl [vmem:[#allocation1] sm:$0xff pattern:$0x75316420]
      %v201 = vld.sshfl [vmem:[#allocation1 + $0x8] sm:$0xff pattern:$0x75316420]
      %v204 = vsel %vm184, %v200, -inf
      %v205 = vrot.slane %v204, 4
      %v206 = vmax.f32 %v204, %v205
      %v207 = vrot.slane %v206, 2
      %v208 = vmax.f32 %v206, %v207
      %v209 = vrot.slane %v208, 1
      %v210 = vmax.f32 %v208, %v209
      %v211 = vsel %vm184, %v201, -inf
      %v212 = vrot.slane %v211, 4
      %v213 = vmax.f32 %v211, %v212
      %v214 = vrot.slane %v213, 2
      %v215 = vmax.f32 %v213, %v214
      %v216 = vrot.slane %v215, 1
      %v217 = vmax.f32 %v215, %v216
      %p218 = scmp.eq.s32.totalorder %s19, 0
      // Predicated region
      $region25: #{spatial_attention_forward.2} parent=23 // pred_check
        %p219 = pneg %p218
      $region26: #{spatial_attention_forward.2} parent=23 // pred_check_branch
        %221 = sbr.rel (%p219) target = $region28
      $region27: #{spatial_attention_forward.2} parent=23 // pred_region
        %v224 = vrot.slane %v198, 7
        %vm225 = vcmask 1040384
        %v226 = vsel %vm225, %v191, %v224
        %v228 = vlaneseq
        %vm229 = vcmp.ge.s32.totalorder %v228, 0
        %vm230 = vcmp.lt.s32.totalorder %v228, 256
        %vm231 = vmand %vm229, %vm230
        %232 = vst.msk [vmem:[%s175] ss:$2 sm:$0x3] %vm231, %v226
        %v235 = vrot.slane %v217, 7
        %v236 = vsel %vm225, %v210, %v235
        %s238 = scalar_lea.vmem %s175, 1
        %239 = vst.msk [vmem:[%s238] ss:$2 sm:$0x3] %vm231, %v236
      $region28: #{spatial_attention_forward.2} parent=23 // pred_fallthru
        _
      %p240 = scmp.gt.s32.totalorder %s19, 0
      // Predicated region
      $region29: #{spatial_attention_forward.2} parent=23 // pred_check
        %p241 = pneg %p240
      $region30: #{spatial_attention_forward.2} parent=23 // pred_check_branch
        %243 = sbr.rel (%p241) target = $region32
      $region31: #{spatial_attention_forward.2} parent=23 // pred_region
        %v244 = vld [vmem:[%s175] ss:$2 sm:$0x3]
        %v247 = vrot.slane %v198, 7
        %vm248 = vcmask 1040384
        %v249 = vsel %vm248, %v191, %v247
        %v251 = vadd.f32 %v244, %v249
        %v252 = vlaneseq
        %vm253 = vcmp.ge.s32.totalorder %v252, 0
        %vm254 = vcmp.lt.s32.totalorder %v252, 256
        %vm255 = vmand %vm253, %vm254
        %256 = vst.msk [vmem:[%s175] ss:$2 sm:$0x3] %vm255, %v251
        %s257 = scalar_lea.vmem %s175, 1
        %v258 = vld [vmem:[%s257] ss:$2 sm:$0x3]
        %v261 = vrot.slane %v217, 7
        %v262 = vsel %vm248, %v210, %v261
        %v264 = vmax.f32 %v258, %v262
        %265 = vst.msk [vmem:[%s257] ss:$2 sm:$0x3] %vm255, %v264
      $region32: #{spatial_attention_forward.2} parent=23 // pred_fallthru
        _
      // Predicated region
      $region33: #{spatial_attention_forward.2} parent=23 // pred_check
        %p266 = pneg %p218
      $region34: #{spatial_attention_forward.2} parent=23 // pred_check_branch
        %268 = sbr.rel (%p266) target = $region36
      $region35: #{spatial_attention_forward.2} parent=23 // pred_region
        %v269 = vld [vmem:[%s175] ss:$2 sm:$0x3]
        %v270 = vmul.f32 %v269, 0.25
        %v271 = vlaneseq
        %vm272 = vcmp.ge.s32.totalorder %v271, 0
        %vm273 = vcmp.lt.s32.totalorder %v271, 256
        %vm274 = vmand %vm272, %vm273
        %275 = vst.msk [vmem:[%s175] ss:$2 sm:$0x3] %vm274, %v270
      $region36: #{spatial_attention_forward.2} parent=23 // pred_fallthru
        _
      %s276 = smul.u32 2, %s18
      %p277 = scmp.lt.s32.totalorder %s17, 1
      %s278 = scalar_select %p277, %s17, 1
      %p279 = scmp.lt.s32.totalorder %s276, 1
      %s280 = scalar_select %p279, %s276, 1
      %s281 = smul.addr %s278, 2
      %s282 = sadd.s32 %s280, %s281
      %s283 = smul.addr %s282, 2
      %s284 = scalar_lea.vmem %s1, %s283
      // Predicated region
      $region37: #{spatial_attention_forward.2} parent=23 // pred_check
        %p285 = pneg %p81
      $region38: #{spatial_attention_forward.2} parent=23 // pred_check_branch
        %287 = sbr.rel (%p285) target = $region40
      $region39: #{spatial_attention_forward.2} parent=23 // pred_region
        %s288 = smul.u32 2, %s18
      $region40: #{spatial_attention_forward.2} parent=23 // pred_fallthru
        _
    $region24: #{spatial_attention_forward.2} parent=5 // pred_fallthru
      _
    %p289 = scmp.le.s32.totalorder 2, %s7
    // Predicated region
    $region41: #{spatial_attention_forward.2} parent=5 // pred_check
      %p290 = pneg %p289
    $region42: #{spatial_attention_forward.2} parent=5 // pred_check_branch
      %292 = sbr.rel (%p290) target = $region44
    $region43: #{spatial_attention_forward.2} parent=5 // pred_region
      %s293 = ssub.s32 %s7, 2
      // Predicated region
      $region45: #{spatial_attention_forward.2} parent=43 // pred_check
        %p294 = pneg %p87
      $region46: #{spatial_attention_forward.2} parent=43 // pred_check_branch
        %296 = sbr.rel (%p294) target = $region48
      $region47: #{spatial_attention_forward.2} parent=43 // pred_region
        %s297 = smul.u32 2, %s21
        %p298 = scmp.lt.s32.totalorder %s20, 1
        %s299 = scalar_select %p298, %s20, 1
        %p300 = scmp.lt.s32.totalorder %s297, 1
        %s301 = scalar_select %p300, %s297, 1
        %s302 = smul.addr %s299, 2
        %s303 = sadd.s32 %s301, %s302
        %s304 = smul.addr %s303, 2
        %s305 = scalar_lea.vmem %s1, %s304
      $region48: #{spatial_attention_forward.2} parent=43 // pred_fallthru
        _
    $region44: #{spatial_attention_forward.2} parent=5 // pred_fallthru
      _
  $region6: #{spatial_attention_forward.2} parent=0 // loop_footer
    %s11 = sadd.s32 1, %s7
  $region7: #{spatial_attention_forward.2} parent=0 // loop_footer_branch
    %6 = sbr.rel target = $region3
  $region8: #{spatial_attention_forward.2} parent=0 // loop_exit
    _

// kernel: spatial_attention_forward.3
$region0: #{spatial_attention_forward.3}
  #allocation0 [shape = 'u32[]', space=smem, size = 0x4, offset = 0x4, fixed_abs, tag = 'smem constant byte address 0x4 - core index']
  #allocation1 [shape = 'u32[72,128]{1,0:T(1,128)}', space=vmem, size = 0x9000, scoped, tag = 'internal scratch']
  #allocation2 [shape = 'f32[2,22,128]{2,1,0:T(8,128)}', space=vmem, size = 0x6000, scoped, tag = 'scratch operand']
  %s0 = inlined_call_operand.vmem [shape: f32[2,2,16,16], index: 0, kind: input, shape index: {}]
  %s1 = inlined_call_operand.vmem [shape: f32[98], index: 1, kind: input, shape index: {}]
  %s2 = inlined_call_operand.hbm [shape: f32[2,16,16], index: 2, kind: output, shape index: {}]
  %s3 = sld [smem:[#allocation0]]
  $region45: #{spatial_attention_forward.3} parent=0
    _
  %s5 = ssub.s32 1, %s3
  %s6 = scalar_select 0, %s5, %s3
  $region1: #{spatial_attention_forward.3} parent=0
    #allocation3 [shape = 'u8[512]{0}', space=smem, size = 0x200, scoped, tag = 'input window, operand 1, single buffered']
    #allocation4 [shape = 's32[2]{0}', space=sflag, size = 0x8, scoped, tag = 'scoped memory for spatial_attention_forward.3']
    #allocation5 [shape = 's32[2]{0}', space=sflag, size = 0x8, scoped, tag = 'scoped memory for spatial_attention_forward.3']
    #allocation6 [shape = 'u8[16384]{0}', space=vmem, size = 0x4000, scoped, tag = 'output window, operand 0']
    %7 = vsyncpa [#allocation5], 0
    %8 = vsyncpa [#allocation4], 0
    %s9 = scalar_lea.sflag [#allocation4], 1
    %10 = vsyncpa %s9, 0
    loop: start=0, step=1, limit=4
    $region2: #{spatial_attention_forward.3} parent=1 // loop_pre_header
      _
    $region3: #{spatial_attention_forward.3} parent=1 // loop_header
      %s12 = sphi 0, %s16
      %p13 = scmp.ge.s32.totalorder %s12, 4
      %s22 = sphi 0, %s24
      %s25 = sphi 0, %s22
      %s26 = sphi 0, %s25
      %s42 = sphi 0, %s26
      %s46 = sphi 0, %s46
      %s48 = sphi 0, %s46
      %s49 = sphi 0, %s48
      %s63 = sphi 0, %s49
      %s69 = sphi 0, %s71
      %s72 = sphi 0, %s69
      %s73 = sphi 0, %s72
      %s89 = sphi 0, %s73
    $region4: #{spatial_attention_forward.3} parent=1 // loop_header_branch
      %15 = sbr.rel (%p13) target = $region8
    $region5: #{spatial_attention_forward.3} parent=1 // loop_body
      %s17 = ssub.s32 %s12, 1
      %s18 = ssub.s32 %s12, 2
      %s19 = sadd.s32 %s12, 1
      %s20 = ssub.s32 %s12, %s19
      %p21 = scmp.eq.s32.totalorder %s20, 0
      %s23 = sadd.s32 %s22, 1
      %s24 = scalar_select %p21, %s22, %s23
      %p27 = pneg %p21
      %p28 = scmp.eq.s32.totalorder %s12, 1
      %p29 = por %p27, %p28
      %p30 = scmp.ne.s32.totalorder %s22, %s25
      %p31 = scmp.eq.s32.totalorder %s12, 0
      %p32 = por %p30, %p31
      %p33 = scmp.ne.s32.totalorder %s22, %s25
      %p34 = scmp.eq.s32.totalorder %s17, 1
      %p35 = por %p33, %p34
      %p36 = scmp.ne.s32.totalorder %s25, %s26
      %p37 = scmp.eq.s32.totalorder %s17, 0
      %p38 = por %p36, %p37
      %p39 = scmp.ne.s32.totalorder %s25, %s26
      %p40 = scmp.eq.s32.totalorder %s18, 1
      %p41 = por %p39, %p40
      %p43 = scmp.ne.s32.totalorder %s26, %s42
      %p44 = scmp.eq.s32.totalorder %s18, 0
      %p45 = por %p43, %p44
      %s47 = sadd.s32 %s46, 1
      %p50 = scmp.eq.s32.totalorder %s12, 1
      %p51 = scmp.ne.s32.totalorder %s46, %s48
      %p52 = scmp.eq.s32.totalorder %s12, 0
      %p53 = por %p51, %p52
      %p54 = scmp.ne.s32.totalorder %s46, %s48
      %p55 = scmp.eq.s32.totalorder %s17, 1
      %p56 = por %p54, %p55
      %p57 = scmp.ne.s32.totalorder %s48, %s49
      %p58 = scmp.eq.s32.totalorder %s17, 0
      %p59 = por %p57, %p58
      %p60 = scmp.ne.s32.totalorder %s48, %s49
      %p61 = scmp.eq.s32.totalorder %s18, 1
      %p62 = por %p60, %p61
      %p64 = scmp.ne.s32.totalorder %s49, %s63
      %p65 = scmp.eq.s32.totalorder %s18, 0
      %p66 = por %p64, %p65
      %s67 = ssub.s32 %s12, %s19
      %p68 = scmp.eq.s32.totalorder %s67, 0
      %s70 = sadd.s32 %s69, 1
      %s71 = scalar_select %p68, %s69, %s70
      %p74 = pneg %p68
      %p75 = scmp.eq.s32.totalorder %s12, 1
      %p76 = por %p74, %p75
      %p77 = scmp.ne.s32.totalorder %s69, %s72
      %p78 = scmp.eq.s32.totalorder %s12, 0
      %p79 = por %p77, %p78
      %p80 = scmp.ne.s32.totalorder %s69, %s72
      %p81 = scmp.eq.s32.totalorder %s17, 1
      %p82 = por %p80, %p81
      %p83 = scmp.ne.s32.totalorder %s72, %s73
      %p84 = scmp.eq.s32.totalorder %s17, 0
      %p85 = por %p83, %p84
      %p86 = scmp.ne.s32.totalorder %s72, %s73
      %p87 = scmp.eq.s32.totalorder %s18, 1
      %p88 = por %p86, %p87
      %p90 = scmp.ne.s32.totalorder %s73, %s89
      %p91 = scmp.eq.s32.totalorder %s18, 0
      %p92 = por %p90, %p91
      %p93 = scmp.le.s32.totalorder 1, %s12
      %p94 = scmp.lt.s32.totalorder %s12, 3
      %p95 = pnand %p93, %p94
      %p96 = pneg %p95
      // Predicated region
      $region9: #{spatial_attention_forward.3} parent=5 // pred_check
        _
      $region10: #{spatial_attention_forward.3} parent=5 // pred_check_branch
        %98 = sbr.rel (%p95) target = $region12
      $region11: #{spatial_attention_forward.3} parent=5 // pred_region
        %s99 = ssub.s32 %s12, 1
        // Predicated region
        $region13: #{spatial_attention_forward.3} parent=11 // pred_check
          %p100 = pneg %p59
        $region14: #{spatial_attention_forward.3} parent=11 // pred_check_branch
          %102 = sbr.rel (%p100) target = $region16
        $region15: #{spatial_attention_forward.3} parent=11 // pred_region
          %104 = vsyncadd [#allocation5], 0
          %s106 = sshll.u32 %s1, 4
          %s107 = int_to_ptr.vmem [resolvable:$true] %s106
          %109 = dma.vmem_to_smem %s107, 16, [#allocation3], [#allocation5]
        $region16: #{spatial_attention_forward.3} parent=11 // pred_fallthru
          _
      $region12: #{spatial_attention_forward.3} parent=5 // pred_fallthru
        _
      %p110 = scmp.lt.s32.totalorder %s12, 2
      // Predicated region
      $region17: #{spatial_attention_forward.3} parent=5 // pred_check
        %p111 = pneg %p110
      $region18: #{spatial_attention_forward.3} parent=5 // pred_check_branch
        %113 = sbr.rel (%p111) target = $region20
      $region19: #{spatial_attention_forward.3} parent=5 // pred_region
        // Predicated region
        $region21: #{spatial_attention_forward.3} parent=19 // pred_check
          %p114 = pneg %p32
        $region22: #{spatial_attention_forward.3} parent=19 // pred_check_branch
          %116 = sbr.rel (%p114) target = $region24
        $region23: #{spatial_attention_forward.3} parent=19 // pred_region
          %p117 = scmp.lt.s32.totalorder %s12, 1
          %s118 = scalar_select %p117, %s12, 1
          %s119 = smul.addr %s118, 4
          %s120 = smul.addr %s119, 8
          %s121 = scalar_lea.vmem %s0, %s120
        $region24: #{spatial_attention_forward.3} parent=19 // pred_fallthru
          _
      $region20: #{spatial_attention_forward.3} parent=5 // pred_fallthru
        _
      %p122 = scmp.le.s32.totalorder 1, %s12
      %p123 = scmp.lt.s32.totalorder %s12, 3
      %p124 = pnand %p122, %p123
      %p125 = pneg %p124
      // Predicated region
      $region25: #{spatial_attention_forward.3} parent=5 // pred_check
        _
      $region26: #{spatial_attention_forward.3} parent=5 // pred_check_branch
        %127 = sbr.rel (%p124) target = $region28
      $region27: #{spatial_attention_forward.3} parent=5 // pred_region
        %s128 = ssub.s32 %s12, 1
        // Predicated region
        $region29: #{spatial_attention_forward.3} parent=27 // pred_check
          %p129 = pneg %p59
        $region30: #{spatial_attention_forward.3} parent=27 // pred_check_branch
          %131 = sbr.rel (%p129) target = $region32
        $region31: #{spatial_attention_forward.3} parent=27 // pred_region
          %133 = dma.done [#allocation5], 16
        $region32: #{spatial_attention_forward.3} parent=27 // pred_fallthru
          _
        %134 = sfence
        %p135 = scmp.lt.s32.totalorder %s17, 1
        %s136 = scalar_select %p135, %s17, 1
        %s137 = smul.addr %s136, 4
        %s138 = smul.addr %s137, 8
        %s139 = scalar_lea.vmem %s0, %s138
        %p140 = pneg %p38
        %p141 = pneg %p35
        %p142 = pneg %p59
        %p143 = pneg %p56
        %p144 = pneg %p85
        %p145 = pneg %p82
        %s146 = sand.u32 %s72, 1
        %s147 = scalar_lea.sflag [#allocation4], %s146
        %s148 = sand.u32 %s72, 1
        %s149 = smul.addr %s148, 16
        %s150 = scalar_lea.vmem [#allocation6], %s149
        %p151 = scmp.lt.s32.totalorder %s17, 1
        %s152 = scalar_select %p151, %s17, 1
        %s153 = smul.addr %s152, 4
        %s154 = smul.addr %s153, 8
        %s155 = scalar_lea.vmem %s0, %s154
        %156 = vst [vmem:[#allocation2] sm:$0xff] 0.0
        %157 = vst [vmem:[#allocation2 + $0x8] sm:$0xff] 0.0
        %158 = vst [vmem:[#allocation2 + $0x10] sm:$0x3f] 0.0
        %159 = vst [vmem:[#allocation2 + $0x18] sm:$0xff] 0.0
        %160 = vst [vmem:[#allocation2 + $0x20] sm:$0xff] 0.0
        %161 = vst [vmem:[#allocation2 + $0x28] sm:$0x3f] 0.0
        %v162 = vld [vmem:[%s155] sm:$0xff]
        %v163 = vld [vmem:[%s155 + $0x8] sm:$0xff]
        %166 = vrot.lane.b32.xlu0 %v162, 3
        %v167 = vpop.permute.xlu0 %166
        %168 = vrot.lane.b32.xlu0 %v163, 3
        %v169 = vpop.permute.xlu0 %168
        %vm172 = vcmask 154648
        %173 = vst.msk [vmem:[#allocation2 + $0x3] sm:$0xff] %vm172, %v167
        %174 = vst.msk [vmem:[#allocation2 + $0xb] sm:$0xff] %vm172, %v169
        %s175 = scalar_lea.vmem %s155, 16
        %v176 = vld [vmem:[%s175] sm:$0xff]
        %v177 = vld [vmem:[%s175 + $0x8] sm:$0xff]
        %180 = vrot.lane.b32.xlu0 %v176, 3
        %v181 = vpop.permute.xlu0 %180
        %182 = vrot.lane.b32.xlu0 %v177, 3
        %v183 = vpop.permute.xlu0 %182
        %s186 = scalar_lea.vmem [#allocation2], 24
        %187 = vst.msk [vmem:[%s186 + $0x3] sm:$0xff] %vm172, %v181
        %188 = vst.msk [vmem:[%s186 + $0xb] sm:$0xff] %vm172, %v183
        %v189 = vld [vmem:[#allocation2] sm:$0xff]
        %v190 = vld [vmem:[#allocation2 + $0x8] sm:$0xff]
        %s191 = sld [smem:[#allocation3]]
        %v192 = vstv %s191
        %v193 = vmul.f32 %v192, %v189
        %v194 = vmul.f32 %v192, %v190
        %v195 = vadd.f32 %v193, 0.0
        %v196 = vadd.f32 %v194, 0.0
        %s197 = sld [smem:[#allocation3 + $0x1]]
        %198 = vrot.lane.b32.xlu0 %v189, 127
        %v199 = vpop.permute.xlu0 %198
        %200 = vrot.lane.b32.xlu0 %v190, 127
        %v201 = vpop.permute.xlu0 %200
        %v202 = vstv %s197
        %v203 = vmul.f32 %v202, %v199
        %v204 = vmul.f32 %v202, %v201
        %v205 = vadd.f32 %v195, %v203
        %v206 = vadd.f32 %v196, %v204
        %s207 = sld [smem:[#allocation3 + $0x2]]
        %208 = vrot.lane.b32.xlu0 %v189, 126
        %v209 = vpop.permute.xlu0 %208
        %210 = vrot.lane.b32.xlu0 %v190, 126
        %v211 = vpop.permute.xlu0 %210
        %v212 = vstv %s207
        %v213 = vmul.f32 %v212, %v209
        %v214 = vmul.f32 %v212, %v211
        %v215 = vadd.f32 %v205, %v213
        %v216 = vadd.f32 %v206, %v214
        %s217 = sld [smem:[#allocation3 + $0x3]]
        %218 = vrot.lane.b32.xlu0 %v189, 125
        %v219 = vpop.permute.xlu0 %218
        %220 = vrot.lane.b32.xlu0 %v190, 125
        %v221 = vpop.permute.xlu0 %220
        %v222 = vstv %s217
        %v223 = vmul.f32 %v222, %v219
        %v224 = vmul.f32 %v222, %v221
        %v225 = vadd.f32 %v215, %v223
        %v226 = vadd.f32 %v216, %v224
        %s227 = sld [smem:[#allocation3 + $0x4]]
        %228 = vrot.lane.b32.xlu0 %v189, 124
        %v229 = vpop.permute.xlu0 %228
        %230 = vrot.lane.b32.xlu0 %v190, 124
        %v231 = vpop.permute.xlu0 %230
        %v232 = vstv %s227
        %v233 = vmul.f32 %v232, %v229
        %v234 = vmul.f32 %v232, %v231
        %v235 = vadd.f32 %v225, %v233
        %v236 = vadd.f32 %v226, %v234
        %s237 = sld [smem:[#allocation3 + $0x5]]
        %238 = vrot.lane.b32.xlu0 %v189, 123
        %v239 = vpop.permute.xlu0 %238
        %240 = vrot.lane.b32.xlu0 %v190, 123
        %v241 = vpop.permute.xlu0 %240
        %v242 = vstv %s237
        %v243 = vmul.f32 %v242, %v239
        %v244 = vmul.f32 %v242, %v241
        %v245 = vadd.f32 %v235, %v243
        %v246 = vadd.f32 %v236, %v244
        %s247 = sld [smem:[#allocation3 + $0x6]]
        %248 = vrot.lane.b32.xlu0 %v189, 122
        %v249 = vpop.permute.xlu0 %248
        %250 = vrot.lane.b32.xlu0 %v190, 122
        %v251 = vpop.permute.xlu0 %250
        %v252 = vstv %s247
        %v253 = vmul.f32 %v252, %v249
        %v254 = vmul.f32 %v252, %v251
        %v255 = vadd.f32 %v245, %v253
        %v256 = vadd.f32 %v246, %v254
        %v257 = vld [vmem:[#allocation2 + $0x1] sm:$0xff]
        %v258 = vld [vmem:[#allocation2 + $0x9] sm:$0xff]
        %s259 = sld [smem:[#allocation3 + $0x7]]
        %v260 = vstv %s259
        %v261 = vmul.f32 %v260, %v257
        %v262 = vmul.f32 %v260, %v258
        %v263 = vadd.f32 %v255, %v261
        %v264 = vadd.f32 %v256, %v262
        %s265 = sld [smem:[#allocation3 + $0x8]]
        %266 = vrot.lane.b32.xlu0 %v257, 127
        %v267 = vpop.permute.xlu0 %266
        %268 = vrot.lane.b32.xlu0 %v258, 127
        %v269 = vpop.permute.xlu0 %268
        %v270 = vstv %s265
        %v271 = vmul.f32 %v270, %v267
        %v272 = vmul.f32 %v270, %v269
        %v273 = vadd.f32 %v263, %v271
        %v274 = vadd.f32 %v264, %v272
        %s275 = sld [smem:[#allocation3 + $0x9]]
        %276 = vrot.lane.b32.xlu0 %v257, 126
        %v277 = vpop.permute.xlu0 %276
        %278 = vrot.lane.b32.xlu0 %v258, 126
        %v279 = vpop.permute.xlu0 %278
        %v280 = vstv %s275
        %v281 = vmul.f32 %v280, %v277
        %v282 = vmul.f32 %v280, %v279
        %v283 = vadd.f32 %v273, %v281
        %v284 = vadd.f32 %v274, %v282
        %s285 = sld [smem:[#allocation3 + $0xa]]
        %286 = vrot.lane.b32.xlu0 %v257, 125
        %v287 = vpop.permute.xlu0 %286
        %288 = vrot.lane.b32.xlu0 %v258, 125
        %v289 = vpop.permute.xlu0 %288
        %v290 = vstv %s285
        %v291 = vmul.f32 %v290, %v287
        %v292 = vmul.f32 %v290, %v289
        %v293 = vadd.f32 %v283, %v291
        %v294 = vadd.f32 %v284, %v292
        %s295 = sld [smem:[#allocation3 + $0xb]]
        %296 = vrot.lane.b32.xlu0 %v257, 124
        %v297 = vpop.permute.xlu0 %296
        %298 = vrot.lane.b32.xlu0 %v258, 124
        %v299 = vpop.permute.xlu0 %298
        %v300 = vstv %s295
        %v301 = vmul.f32 %v300, %v297
        %v302 = vmul.f32 %v300, %v299
        %v303 = vadd.f32 %v293, %v301
        %v304 = vadd.f32 %v294, %v302
        %s305 = sld [smem:[#allocation3 + $0xc]]
        %306 = vrot.lane.b32.xlu0 %v257, 123
        %v307 = vpop.permute.xlu0 %306
        %308 = vrot.lane.b32.xlu0 %v258, 123
        %v309 = vpop.permute.xlu0 %308
        %v310 = vstv %s305
        %v311 = vmul.f32 %v310, %v307
        %v312 = vmul.f32 %v310, %v309
        %v313 = vadd.f32 %v303, %v311
        %v314 = vadd.f32 %v304, %v312
        %s315 = sld [smem:[#allocation3 + $0xd]]
        %316 = vrot.lane.b32.xlu0 %v257, 122
        %v317 = vpop.permute.xlu0 %316
        %318 = vrot.lane.b32.xlu0 %v258, 122
        %v319 = vpop.permute.xlu0 %318
        %v320 = vstv %s315
        %v321 = vmul.f32 %v320, %v317
        %v322 = vmul.f32 %v320, %v319
        %v323 = vadd.f32 %v313, %v321
        %v324 = vadd.f32 %v314, %v322
        %v325 = vld [vmem:[#allocation2 + $0x2] sm:$0xff]
        %v326 = vld [vmem:[#allocation2 + $0xa] sm:$0xff]
        %s327 = sld [smem:[#allocation3 + $0xe]]
        %v328 = vstv %s327
        %v329 = vmul.f32 %v328, %v325
        %v330 = vmul.f32 %v328, %v326
        %v331 = vadd.f32 %v323, %v329
        %v332 = vadd.f32 %v324, %v330
        %s333 = sld [smem:[#allocation3 + $0xf]]
        %334 = vrot.lane.b32.xlu0 %v325, 127
        %v335 = vpop.permute.xlu0 %334
        %336 = vrot.lane.b32.xlu0 %v326, 127
        %v337 = vpop.permute.xlu0 %336
        %v338 = vstv %s333
        %v339 = vmul.f32 %v338, %v335
        %v340 = vmul.f32 %v338, %v337
        %v341 = vadd.f32 %v331, %v339
        %v342 = vadd.f32 %v332, %v340
        %s343 = sld [smem:[#allocation3 + $0x10]]
        %344 = vrot.lane.b32.xlu0 %v325, 126
        %v345 = vpop.permute.xlu0 %344
        %346 = vrot.lane.b32.xlu0 %v326, 126
        %v347 = vpop.permute.xlu0 %346
        %v348 = vstv %s343
        %v349 = vmul.f32 %v348, %v345
        %v350 = vmul.f32 %v348, %v347
        %v351 = vadd.f32 %v341, %v349
        %v352 = vadd.f32 %v342, %v350
        %s353 = sld [smem:[#allocation3 + $0x11]]
        %354 = vrot.lane.b32.xlu0 %v325, 125
        %v355 = vpop.permute.xlu0 %354
        %356 = vrot.lane.b32.xlu0 %v326, 125
        %v357 = vpop.permute.xlu0 %356
        %v358 = vstv %s353
        %v359 = vmul.f32 %v358, %v355
        %v360 = vmul.f32 %v358, %v357
        %v361 = vadd.f32 %v351, %v359
        %v362 = vadd.f32 %v352, %v360
        %s363 = sld [smem:[#allocation3 + $0x12]]
        %364 = vrot.lane.b32.xlu0 %v325, 124
        %v365 = vpop.permute.xlu0 %364
        %366 = vrot.lane.b32.xlu0 %v326, 124
        %v367 = vpop.permute.xlu0 %366
        %v368 = vstv %s363
        %v369 = vmul.f32 %v368, %v365
        %v370 = vmul.f32 %v368, %v367
        %v371 = vadd.f32 %v361, %v369
        %v372 = vadd.f32 %v362, %v370
        %s373 = sld [smem:[#allocation3 + $0x13]]
        %374 = vrot.lane.b32.xlu0 %v325, 123
        %v375 = vpop.permute.xlu0 %374
        %376 = vrot.lane.b32.xlu0 %v326, 123
        %v377 = vpop.permute.xlu0 %376
        %v378 = vstv %s373
        %v379 = vmul.f32 %v378, %v375
        %v380 = vmul.f32 %v378, %v377
        %v381 = vadd.f32 %v371, %v379
        %v382 = vadd.f32 %v372, %v380
        %s383 = sld [smem:[#allocation3 + $0x14]]
        %384 = vrot.lane.b32.xlu0 %v325, 122
        %v385 = vpop.permute.xlu0 %384
        %386 = vrot.lane.b32.xlu0 %v326, 122
        %v387 = vpop.permute.xlu0 %386
        %v388 = vstv %s383
        %v389 = vmul.f32 %v388, %v385
        %v390 = vmul.f32 %v388, %v387
        %v391 = vadd.f32 %v381, %v389
        %v392 = vadd.f32 %v382, %v390
        %v393 = vld [vmem:[#allocation2 + $0x3] sm:$0xff]
        %v394 = vld [vmem:[#allocation2 + $0xb] sm:$0xff]
        %s395 = sld [smem:[#allocation3 + $0x15]]
        %v396 = vstv %s395
        %v397 = vmul.f32 %v396, %v393
        %v398 = vmul.f32 %v396, %v394
        %v399 = vadd.f32 %v391, %v397
        %v400 = vadd.f32 %v392, %v398
        %s401 = sld [smem:[#allocation3 + $0x16]]
        %402 = vrot.lane.b32.xlu0 %v393, 127
        %v403 = vpop.permute.xlu0 %402
        %404 = vrot.lane.b32.xlu0 %v394, 127
        %v405 = vpop.permute.xlu0 %404
        %v406 = vstv %s401
        %v407 = vmul.f32 %v406, %v403
        %v408 = vmul.f32 %v406, %v405
        %v409 = vadd.f32 %v399, %v407
        %v410 = vadd.f32 %v400, %v408
        %s411 = sld [smem:[#allocation3 + $0x17]]
        %412 = vrot.lane.b32.xlu0 %v393, 126
        %v413 = vpop.permute.xlu0 %412
        %414 = vrot.lane.b32.xlu0 %v394, 126
        %v415 = vpop.permute.xlu0 %414
        %v416 = vstv %s411
        %v417 = vmul.f32 %v416, %v413
        %v418 = vmul.f32 %v416, %v415
        %v419 = vadd.f32 %v409, %v417
        %v420 = vadd.f32 %v410, %v418
        %s421 = sld [smem:[#allocation3 + $0x18]]
        %422 = vrot.lane.b32.xlu0 %v393, 125
        %v423 = vpop.permute.xlu0 %422
        %424 = vrot.lane.b32.xlu0 %v394, 125
        %v425 = vpop.permute.xlu0 %424
        %v426 = vstv %s421
        %v427 = vmul.f32 %v426, %v423
        %v428 = vmul.f32 %v426, %v425
        %v429 = vadd.f32 %v419, %v427
        %v430 = vadd.f32 %v420, %v428
        %s431 = sld [smem:[#allocation3 + $0x19]]
        %432 = vrot.lane.b32.xlu0 %v393, 124
        %v433 = vpop.permute.xlu0 %432
        %434 = vrot.lane.b32.xlu0 %v394, 124
        %v435 = vpop.permute.xlu0 %434
        %v436 = vstv %s431
        %v437 = vmul.f32 %v436, %v433
        %v438 = vmul.f32 %v436, %v435
        %v439 = vadd.f32 %v429, %v437
        %v440 = vadd.f32 %v430, %v438
        %s441 = sld [smem:[#allocation3 + $0x1a]]
        %442 = vrot.lane.b32.xlu0 %v393, 123
        %v443 = vpop.permute.xlu0 %442
        %444 = vrot.lane.b32.xlu0 %v394, 123
        %v445 = vpop.permute.xlu0 %444
        %v446 = vstv %s441
        %v447 = vmul.f32 %v446, %v443
        %v448 = vmul.f32 %v446, %v445
        %v449 = vadd.f32 %v439, %v447
        %v450 = vadd.f32 %v440, %v448
        %s451 = sld [smem:[#allocation3 + $0x1b]]
        %452 = vrot.lane.b32.xlu0 %v393, 122
        %v453 = vpop.permute.xlu0 %452
        %454 = vrot.lane.b32.xlu0 %v394, 122
        %v455 = vpop.permute.xlu0 %454
        %v456 = vstv %s451
        %v457 = vmul.f32 %v456, %v453
        %v458 = vmul.f32 %v456, %v455
        %v459 = vadd.f32 %v449, %v457
        %v460 = vadd.f32 %v450, %v458
        %v461 = vld [vmem:[#allocation2 + $0x4] sm:$0xff]
        %v462 = vld [vmem:[#allocation2 + $0xc] sm:$0xff]
        %s463 = sld [smem:[#allocation3 + $0x1c]]
        %v464 = vstv %s463
        %v465 = vmul.f32 %v464, %v461
        %v466 = vmul.f32 %v464, %v462
        %v467 = vadd.f32 %v459, %v465
        %v468 = vadd.f32 %v460, %v466
        %s469 = sld [smem:[#allocation3 + $0x1d]]
        %470 = vrot.lane.b32.xlu0 %v461, 127
        %v471 = vpop.permute.xlu0 %470
        %472 = vrot.lane.b32.xlu0 %v462, 127
        %v473 = vpop.permute.xlu0 %472
        %v474 = vstv %s469
        %v475 = vmul.f32 %v474, %v471
        %v476 = vmul.f32 %v474, %v473
        %v477 = vadd.f32 %v467, %v475
        %v478 = vadd.f32 %v468, %v476
        %s479 = sld [smem:[#allocation3 + $0x1e]]
        %480 = vrot.lane.b32.xlu0 %v461, 126
        %v481 = vpop.permute.xlu0 %480
        %482 = vrot.lane.b32.xlu0 %v462, 126
        %v483 = vpop.permute.xlu0 %482
        %v484 = vstv %s479
        %v485 = vmul.f32 %v484, %v481
        %v486 = vmul.f32 %v484, %v483
        %v487 = vadd.f32 %v477, %v485
        %v488 = vadd.f32 %v478, %v486
        %s489 = sld [smem:[#allocation3 + $0x1f]]
        %490 = vrot.lane.b32.xlu0 %v461, 125
        %v491 = vpop.permute.xlu0 %490
        %492 = vrot.lane.b32.xlu0 %v462, 125
        %v493 = vpop.permute.xlu0 %492
        %v494 = vstv %s489
        %v495 = vmul.f32 %v494, %v491
        %v496 = vmul.f32 %v494, %v493
        %v497 = vadd.f32 %v487, %v495
        %v498 = vadd.f32 %v488, %v496
        %s499 = sld [smem:[#allocation3 + $0x20]]
        %500 = vrot.lane.b32.xlu0 %v461, 124
        %v501 = vpop.permute.xlu0 %500
        %502 = vrot.lane.b32.xlu0 %v462, 124
        %v503 = vpop.permute.xlu0 %502
        %v504 = vstv %s499
        %v505 = vmul.f32 %v504, %v501
        %v506 = vmul.f32 %v504, %v503
        %v507 = vadd.f32 %v497, %v505
        %v508 = vadd.f32 %v498, %v506
        %s509 = sld [smem:[#allocation3 + $0x21]]
        %510 = vrot.lane.b32.xlu0 %v461, 123
        %v511 = vpop.permute.xlu0 %510
        %512 = vrot.lane.b32.xlu0 %v462, 123
        %v513 = vpop.permute.xlu0 %512
        %v514 = vstv %s509
        %v515 = vmul.f32 %v514, %v511
        %v516 = vmul.f32 %v514, %v513
        %v517 = vadd.f32 %v507, %v515
        %v518 = vadd.f32 %v508, %v516
        %s519 = sld [smem:[#allocation3 + $0x22]]
        %520 = vrot.lane.b32.xlu0 %v461, 122
        %v521 = vpop.permute.xlu0 %520
        %522 = vrot.lane.b32.xlu0 %v462, 122
        %v523 = vpop.permute.xlu0 %522
        %v524 = vstv %s519
        %v525 = vmul.f32 %v524, %v521
        %v526 = vmul.f32 %v524, %v523
        %v527 = vadd.f32 %v517, %v525
        %v528 = vadd.f32 %v518, %v526
        %v529 = vld [vmem:[#allocation2 + $0x5] sm:$0xff]
        %v530 = vld [vmem:[#allocation2 + $0xd] sm:$0xff]
        %s531 = sld [smem:[#allocation3 + $0x23]]
        %v532 = vstv %s531
        %v533 = vmul.f32 %v532, %v529
        %v534 = vmul.f32 %v532, %v530
        %v535 = vadd.f32 %v527, %v533
        %v536 = vadd.f32 %v528, %v534
        %s537 = sld [smem:[#allocation3 + $0x24]]
        %538 = vrot.lane.b32.xlu0 %v529, 127
        %v539 = vpop.permute.xlu0 %538
        %540 = vrot.lane.b32.xlu0 %v530, 127
        %v541 = vpop.permute.xlu0 %540
        %v542 = vstv %s537
        %v543 = vmul.f32 %v542, %v539
        %v544 = vmul.f32 %v542, %v541
        %v545 = vadd.f32 %v535, %v543
        %v546 = vadd.f32 %v536, %v544
        %s547 = sld [smem:[#allocation3 + $0x25]]
        %548 = vrot.lane.b32.xlu0 %v529, 126
        %v549 = vpop.permute.xlu0 %548
        %550 = vrot.lane.b32.xlu0 %v530, 126
        %v551 = vpop.permute.xlu0 %550
        %v552 = vstv %s547
        %v553 = vmul.f32 %v552, %v549
        %v554 = vmul.f32 %v552, %v551
        %v555 = vadd.f32 %v545, %v553
        %v556 = vadd.f32 %v546, %v554
        %s557 = sld [smem:[#allocation3 + $0x26]]
        %558 = vrot.lane.b32.xlu0 %v529, 125
        %v559 = vpop.permute.xlu0 %558
        %560 = vrot.lane.b32.xlu0 %v530, 125
        %v561 = vpop.permute.xlu0 %560
        %v562 = vstv %s557
        %v563 = vmul.f32 %v562, %v559
        %v564 = vmul.f32 %v562, %v561
        %v565 = vadd.f32 %v555, %v563
        %v566 = vadd.f32 %v556, %v564
        %s567 = sld [smem:[#allocation3 + $0x27]]
        %568 = vrot.lane.b32.xlu0 %v529, 124
        %v569 = vpop.permute.xlu0 %568
        %570 = vrot.lane.b32.xlu0 %v530, 124
        %v571 = vpop.permute.xlu0 %570
        %v572 = vstv %s567
        %v573 = vmul.f32 %v572, %v569
        %v574 = vmul.f32 %v572, %v571
        %v575 = vadd.f32 %v565, %v573
        %v576 = vadd.f32 %v566, %v574
        %s577 = sld [smem:[#allocation3 + $0x28]]
        %578 = vrot.lane.b32.xlu0 %v529, 123
        %v579 = vpop.permute.xlu0 %578
        %580 = vrot.lane.b32.xlu0 %v530, 123
        %v581 = vpop.permute.xlu0 %580
        %v582 = vstv %s577
        %v583 = vmul.f32 %v582, %v579
        %v584 = vmul.f32 %v582, %v581
        %v585 = vadd.f32 %v575, %v583
        %v586 = vadd.f32 %v576, %v584
        %s587 = sld [smem:[#allocation3 + $0x29]]
        %588 = vrot.lane.b32.xlu0 %v529, 122
        %v589 = vpop.permute.xlu0 %588
        %590 = vrot.lane.b32.xlu0 %v530, 122
        %v591 = vpop.permute.xlu0 %590
        %v592 = vstv %s587
        %v593 = vmul.f32 %v592, %v589
        %v594 = vmul.f32 %v592, %v591
        %v595 = vadd.f32 %v585, %v593
        %v596 = vadd.f32 %v586, %v594
        %v597 = vld [vmem:[#allocation2 + $0x6] sm:$0xff]
        %v598 = vld [vmem:[#allocation2 + $0xe] sm:$0xff]
        %s599 = sld [smem:[#allocation3 + $0x2a]]
        %v600 = vstv %s599
        %v601 = vmul.f32 %v600, %v597
        %v602 = vmul.f32 %v600, %v598
        %v603 = vadd.f32 %v595, %v601
        %v604 = vadd.f32 %v596, %v602
        %s605 = sld [smem:[#allocation3 + $0x2b]]
        %606 = vrot.lane.b32.xlu0 %v597, 127
        %v607 = vpop.permute.xlu0 %606
        %608 = vrot.lane.b32.xlu0 %v598, 127
        %v609 = vpop.permute.xlu0 %608
        %v610 = vstv %s605
        %v611 = vmul.f32 %v610, %v607
        %v612 = vmul.f32 %v610, %v609
        %v613 = vadd.f32 %v603, %v611
        %v614 = vadd.f32 %v604, %v612
        %s615 = sld [smem:[#allocation3 + $0x2c]]
        %616 = vrot.lane.b32.xlu0 %v597, 126
        %v617 = vpop.permute.xlu0 %616
        %618 = vrot.lane.b32.xlu0 %v598, 126
        %v619 = vpop.permute.xlu0 %618
        %v620 = vstv %s615
        %v621 = vmul.f32 %v620, %v617
        %v622 = vmul.f32 %v620, %v619
        %v623 = vadd.f32 %v613, %v621
        %v624 = vadd.f32 %v614, %v622
        %s625 = sld [smem:[#allocation3 + $0x2d]]
        %626 = vrot.lane.b32.xlu0 %v597, 125
        %v627 = vpop.permute.xlu0 %626
        %628 = vrot.lane.b32.xlu0 %v598, 125
        %v629 = vpop.permute.xlu0 %628
        %v630 = vstv %s625
        %v631 = vmul.f32 %v630, %v627
        %v632 = vmul.f32 %v630, %v629
        %v633 = vadd.f32 %v623, %v631
        %v634 = vadd.f32 %v624, %v632
        %s635 = sld [smem:[#allocation3 + $0x2e]]
        %636 = vrot.lane.b32.xlu0 %v597, 124
        %v637 = vpop.permute.xlu0 %636
        %638 = vrot.lane.b32.xlu0 %v598, 124
        %v639 = vpop.permute.xlu0 %638
        %v640 = vstv %s635
        %v641 = vmul.f32 %v640, %v637
        %v642 = vmul.f32 %v640, %v639
        %v643 = vadd.f32 %v633, %v641
        %v644 = vadd.f32 %v634, %v642
        %s645 = sld [smem:[#allocation3 + $0x2f]]
        %646 = vrot.lane.b32.xlu0 %v597, 123
        %v647 = vpop.permute.xlu0 %646
        %648 = vrot.lane.b32.xlu0 %v598, 123
        %v649 = vpop.permute.xlu0 %648
        %v650 = vstv %s645
        %v651 = vmul.f32 %v650, %v647
        %v652 = vmul.f32 %v650, %v649
        %v653 = vadd.f32 %v643, %v651
        %v654 = vadd.f32 %v644, %v652
        %s655 = sld [smem:[#allocation3 + $0x30]]
        %656 = vrot.lane.b32.xlu0 %v597, 122
        %v657 = vpop.permute.xlu0 %656
        %658 = vrot.lane.b32.xlu0 %v598, 122
        %v659 = vpop.permute.xlu0 %658
        %v660 = vstv %s655
        %v661 = vmul.f32 %v660, %v657
        %v662 = vmul.f32 %v660, %v659
        %v663 = vadd.f32 %v653, %v661
        %v664 = vadd.f32 %v654, %v662
        %v665 = vld [vmem:[%s186] sm:$0xff]
        %v666 = vld [vmem:[%s186 + $0x8] sm:$0xff]
        %s667 = sld [smem:[#allocation3 + $0x31]]
        %v668 = vstv %s667
        %v669 = vmul.f32 %v668, %v665
        %v670 = vmul.f32 %v668, %v666
        %v671 = vadd.f32 %v663, %v669
        %v672 = vadd.f32 %v664, %v670
        %s673 = sld [smem:[#allocation3 + $0x32]]
        %674 = vrot.lane.b32.xlu0 %v665, 127
        %v675 = vpop.permute.xlu0 %674
        %676 = vrot.lane.b32.xlu0 %v666, 127
        %v677 = vpop.permute.xlu0 %676
        %v678 = vstv %s673
        %v679 = vmul.f32 %v678, %v675
        %v680 = vmul.f32 %v678, %v677
        %v681 = vadd.f32 %v671, %v679
        %v682 = vadd.f32 %v672, %v680
        %s683 = sld [smem:[#allocation3 + $0x33]]
        %684 = vrot.lane.b32.xlu0 %v665, 126
        %v685 = vpop.permute.xlu0 %684
        %686 = vrot.lane.b32.xlu0 %v666, 126
        %v687 = vpop.permute.xlu0 %686
        %v688 = vstv %s683
        %v689 = vmul.f32 %v688, %v685
        %v690 = vmul.f32 %v688, %v687
        %v691 = vadd.f32 %v681, %v689
        %v692 = vadd.f32 %v682, %v690
        %s693 = sld [smem:[#allocation3 + $0x34]]
        %694 = vrot.lane.b32.xlu0 %v665, 125
        %v695 = vpop.permute.xlu0 %694
        %696 = vrot.lane.b32.xlu0 %v666, 125
        %v697 = vpop.permute.xlu0 %696
        %v698 = vstv %s693
        %v699 = vmul.f32 %v698, %v695
        %v700 = vmul.f32 %v698, %v697
        %v701 = vadd.f32 %v691, %v699
        %v702 = vadd.f32 %v692, %v700
        %s703 = sld [smem:[#allocation3 + $0x35]]
        %704 = vrot.lane.b32.xlu0 %v665, 124
        %v705 = vpop.permute.xlu0 %704
        %706 = vrot.lane.b32.xlu0 %v666, 124
        %v707 = vpop.permute.xlu0 %706
        %v708 = vstv %s703
        %v709 = vmul.f32 %v708, %v705
        %v710 = vmul.f32 %v708, %v707
        %v711 = vadd.f32 %v701, %v709
        %v712 = vadd.f32 %v702, %v710
        %s713 = sld [smem:[#allocation3 + $0x36]]
        %714 = vrot.lane.b32.xlu0 %v665, 123
        %v715 = vpop.permute.xlu0 %714
        %716 = vrot.lane.b32.xlu0 %v666, 123
        %v717 = vpop.permute.xlu0 %716
        %v718 = vstv %s713
        %v719 = vmul.f32 %v718, %v715
        %v720 = vmul.f32 %v718, %v717
        %v721 = vadd.f32 %v711, %v719
        %v722 = vadd.f32 %v712, %v720
        %s723 = sld [smem:[#allocation3 + $0x37]]
        %724 = vrot.lane.b32.xlu0 %v665, 122
        %v725 = vpop.permute.xlu0 %724
        %726 = vrot.lane.b32.xlu0 %v666, 122
        %v727 = vpop.permute.xlu0 %726
        %v728 = vstv %s723
        %v729 = vmul.f32 %v728, %v725
        %v730 = vmul.f32 %v728, %v727
        %v731 = vadd.f32 %v721, %v729
        %v732 = vadd.f32 %v722, %v730
        %v733 = vld [vmem:[%s186 + $0x1] sm:$0xff]
        %v734 = vld [vmem:[%s186 + $0x9] sm:$0xff]
        %s735 = sld [smem:[#allocation3 + $0x38]]
        %v736 = vstv %s735
        %v737 = vmul.f32 %v736, %v733
        %v738 = vmul.f32 %v736, %v734
        %v739 = vadd.f32 %v731, %v737
        %v740 = vadd.f32 %v732, %v738
        %s741 = sld [smem:[#allocation3 + $0x39]]
        %742 = vrot.lane.b32.xlu0 %v733, 127
        %v743 = vpop.permute.xlu0 %742
        %744 = vrot.lane.b32.xlu0 %v734, 127
        %v745 = vpop.permute.xlu0 %744
        %v746 = vstv %s741
        %v747 = vmul.f32 %v746, %v743
        %v748 = vmul.f32 %v746, %v745
        %v749 = vadd.f32 %v739, %v747
        %v750 = vadd.f32 %v740, %v748
        %s751 = sld [smem:[#allocation3 + $0x3a]]
        %752 = vrot.lane.b32.xlu0 %v733, 126
        %v753 = vpop.permute.xlu0 %752
        %754 = vrot.lane.b32.xlu0 %v734, 126
        %v755 = vpop.permute.xlu0 %754
        %v756 = vstv %s751
        %v757 = vmul.f32 %v756, %v753
        %v758 = vmul.f32 %v756, %v755
        %v759 = vadd.f32 %v749, %v757
        %v760 = vadd.f32 %v750, %v758
        %s761 = sld [smem:[#allocation3 + $0x3b]]
        %762 = vrot.lane.b32.xlu0 %v733, 125
        %v763 = vpop.permute.xlu0 %762
        %764 = vrot.lane.b32.xlu0 %v734, 125
        %v765 = vpop.permute.xlu0 %764
        %v766 = vstv %s761
        %v767 = vmul.f32 %v766, %v763
        %v768 = vmul.f32 %v766, %v765
        %v769 = vadd.f32 %v759, %v767
        %v770 = vadd.f32 %v760, %v768
        %s771 = sld [smem:[#allocation3 + $0x3c]]
        %772 = vrot.lane.b32.xlu0 %v733, 124
        %v773 = vpop.permute.xlu0 %772
        %774 = vrot.lane.b32.xlu0 %v734, 124
        %v775 = vpop.permute.xlu0 %774
        %v776 = vstv %s771
        %v777 = vmul.f32 %v776, %v773
        %v778 = vmul.f32 %v776, %v775
        %v779 = vadd.f32 %v769, %v777
        %v780 = vadd.f32 %v770, %v778
        %s781 = sld [smem:[#allocation3 + $0x3d]]
        %782 = vrot.lane.b32.xlu0 %v733, 123
        %v783 = vpop.permute.xlu0 %782
        %784 = vrot.lane.b32.xlu0 %v734, 123
        %v785 = vpop.permute.xlu0 %784
        %v786 = vstv %s781
        %v787 = vmul.f32 %v786, %v783
        %v788 = vmul.f32 %v786, %v785
        %v789 = vadd.f32 %v779, %v787
        %v790 = vadd.f32 %v780, %v788
        %s791 = sld [smem:[#allocation3 + $0x3e]]
        %792 = vrot.lane.b32.xlu0 %v733, 122
        %v793 = vpop.permute.xlu0 %792
        %794 = vrot.lane.b32.xlu0 %v734, 122
        %v795 = vpop.permute.xlu0 %794
        %v796 = vstv %s791
        %v797 = vmul.f32 %v796, %v793
        %v798 = vmul.f32 %v796, %v795
        %v799 = vadd.f32 %v789, %v797
        %v800 = vadd.f32 %v790, %v798
        %v801 = vld [vmem:[%s186 + $0x2] sm:$0xff]
        %v802 = vld [vmem:[%s186 + $0xa] sm:$0xff]
        %s803 = sld [smem:[#allocation3 + $0x3f]]
        %v804 = vstv %s803
        %v805 = vmul.f32 %v804, %v801
        %v806 = vmul.f32 %v804, %v802
        %v807 = vadd.f32 %v799, %v805
        %v808 = vadd.f32 %v800, %v806
        %s809 = sld [smem:[#allocation3 + $0x40]]
        %810 = vrot.lane.b32.xlu0 %v801, 127
        %v811 = vpop.permute.xlu0 %810
        %812 = vrot.lane.b32.xlu0 %v802, 127
        %v813 = vpop.permute.xlu0 %812
        %v814 = vstv %s809
        %v815 = vmul.f32 %v814, %v811
        %v816 = vmul.f32 %v814, %v813
        %v817 = vadd.f32 %v807, %v815
        %v818 = vadd.f32 %v808, %v816
        %s819 = sld [smem:[#allocation3 + $0x41]]
        %820 = vrot.lane.b32.xlu0 %v801, 126
        %v821 = vpop.permute.xlu0 %820
        %822 = vrot.lane.b32.xlu0 %v802, 126
        %v823 = vpop.permute.xlu0 %822
        %v824 = vstv %s819
        %v825 = vmul.f32 %v824, %v821
        %v826 = vmul.f32 %v824, %v823
        %v827 = vadd.f32 %v817, %v825
        %v828 = vadd.f32 %v818, %v826
        %s829 = sld [smem:[#allocation3 + $0x42]]
        %830 = vrot.lane.b32.xlu0 %v801, 125
        %v831 = vpop.permute.xlu0 %830
        %832 = vrot.lane.b32.xlu0 %v802, 125
        %v833 = vpop.permute.xlu0 %832
        %v834 = vstv %s829
        %v835 = vmul.f32 %v834, %v831
        %v836 = vmul.f32 %v834, %v833
        %v837 = vadd.f32 %v827, %v835
        %v838 = vadd.f32 %v828, %v836
        %s839 = sld [smem:[#allocation3 + $0x43]]
        %840 = vrot.lane.b32.xlu0 %v801, 124
        %v841 = vpop.permute.xlu0 %840
        %842 = vrot.lane.b32.xlu0 %v802, 124
        %v843 = vpop.permute.xlu0 %842
        %v844 = vstv %s839
        %v845 = vmul.f32 %v844, %v841
        %v846 = vmul.f32 %v844, %v843
        %v847 = vadd.f32 %v837, %v845
        %v848 = vadd.f32 %v838, %v846
        %s849 = sld [smem:[#allocation3 + $0x44]]
        %850 = vrot.lane.b32.xlu0 %v801, 123
        %v851 = vpop.permute.xlu0 %850
        %852 = vrot.lane.b32.xlu0 %v802, 123
        %v853 = vpop.permute.xlu0 %852
        %v854 = vstv %s849
        %v855 = vmul.f32 %v854, %v851
        %v856 = vmul.f32 %v854, %v853
        %v857 = vadd.f32 %v847, %v855
        %v858 = vadd.f32 %v848, %v856
        %s859 = sld [smem:[#allocation3 + $0x45]]
        %860 = vrot.lane.b32.xlu0 %v801, 122
        %v861 = vpop.permute.xlu0 %860
        %862 = vrot.lane.b32.xlu0 %v802, 122
        %v863 = vpop.permute.xlu0 %862
        %v864 = vstv %s859
        %v865 = vmul.f32 %v864, %v861
        %v866 = vmul.f32 %v864, %v863
        %v867 = vadd.f32 %v857, %v865
        %v868 = vadd.f32 %v858, %v866
        %v869 = vld [vmem:[%s186 + $0x3] sm:$0xff]
        %v870 = vld [vmem:[%s186 + $0xb] sm:$0xff]
        %s871 = sld [smem:[#allocation3 + $0x46]]
        %v872 = vstv %s871
        %v873 = vmul.f32 %v872, %v869
        %v874 = vmul.f32 %v872, %v870
        %v875 = vadd.f32 %v867, %v873
        %v876 = vadd.f32 %v868, %v874
        %s877 = sld [smem:[#allocation3 + $0x47]]
        %878 = vrot.lane.b32.xlu0 %v869, 127
        %v879 = vpop.permute.xlu0 %878
        %880 = vrot.lane.b32.xlu0 %v870, 127
        %v881 = vpop.permute.xlu0 %880
        %v882 = vstv %s877
        %v883 = vmul.f32 %v882, %v879
        %v884 = vmul.f32 %v882, %v881
        %v885 = vadd.f32 %v875, %v883
        %v886 = vadd.f32 %v876, %v884
        %s887 = sld [smem:[#allocation3 + $0x48]]
        %888 = vrot.lane.b32.xlu0 %v869, 126
        %v889 = vpop.permute.xlu0 %888
        %890 = vrot.lane.b32.xlu0 %v870, 126
        %v891 = vpop.permute.xlu0 %890
        %v892 = vstv %s887
        %v893 = vmul.f32 %v892, %v889
        %v894 = vmul.f32 %v892, %v891
        %v895 = vadd.f32 %v885, %v893
        %v896 = vadd.f32 %v886, %v894
        %s897 = sld [smem:[#allocation3 + $0x49]]
        %898 = vrot.lane.b32.xlu0 %v869, 125
        %v899 = vpop.permute.xlu0 %898
        %900 = vrot.lane.b32.xlu0 %v870, 125
        %v901 = vpop.permute.xlu0 %900
        %v902 = vstv %s897
        %v903 = vmul.f32 %v902, %v899
        %v904 = vmul.f32 %v902, %v901
        %v905 = vadd.f32 %v895, %v903
        %v906 = vadd.f32 %v896, %v904
        %s907 = sld [smem:[#allocation3 + $0x4a]]
        %908 = vrot.lane.b32.xlu0 %v869, 124
        %v909 = vpop.permute.xlu0 %908
        %910 = vrot.lane.b32.xlu0 %v870, 124
        %v911 = vpop.permute.xlu0 %910
        %v912 = vstv %s907
        %v913 = vmul.f32 %v912, %v909
        %v914 = vmul.f32 %v912, %v911
        %v915 = vadd.f32 %v905, %v913
        %v916 = vadd.f32 %v906, %v914
        %s917 = sld [smem:[#allocation3 + $0x4b]]
        %918 = vrot.lane.b32.xlu0 %v869, 123
        %v919 = vpop.permute.xlu0 %918
        %920 = vrot.lane.b32.xlu0 %v870, 123
        %v921 = vpop.permute.xlu0 %920
        %v922 = vstv %s917
        %v923 = vmul.f32 %v922, %v919
        %v924 = vmul.f32 %v922, %v921
        %v925 = vadd.f32 %v915, %v923
        %v926 = vadd.f32 %v916, %v924
        %s927 = sld [smem:[#allocation3 + $0x4c]]
        %928 = vrot.lane.b32.xlu0 %v869, 122
        %v929 = vpop.permute.xlu0 %928
        %930 = vrot.lane.b32.xlu0 %v870, 122
        %v931 = vpop.permute.xlu0 %930
        %v932 = vstv %s927
        %v933 = vmul.f32 %v932, %v929
        %v934 = vmul.f32 %v932, %v931
        %v935 = vadd.f32 %v925, %v933
        %v936 = vadd.f32 %v926, %v934
        %v937 = vld [vmem:[%s186 + $0x4] sm:$0xff]
        %v938 = vld [vmem:[%s186 + $0xc] sm:$0xff]
        %s939 = sld [smem:[#allocation3 + $0x4d]]
        %v940 = vstv %s939
        %v941 = vmul.f32 %v940, %v937
        %v942 = vmul.f32 %v940, %v938
        %v943 = vadd.f32 %v935, %v941
        %v944 = vadd.f32 %v936, %v942
        %s945 = sld [smem:[#allocation3 + $0x4e]]
        %946 = vrot.lane.b32.xlu0 %v937, 127
        %v947 = vpop.permute.xlu0 %946
        %948 = vrot.lane.b32.xlu0 %v938, 127
        %v949 = vpop.permute.xlu0 %948
        %v950 = vstv %s945
        %v951 = vmul.f32 %v950, %v947
        %v952 = vmul.f32 %v950, %v949
        %v953 = vadd.f32 %v943, %v951
        %v954 = vadd.f32 %v944, %v952
        %s955 = sld [smem:[#allocation3 + $0x4f]]
        %956 = vrot.lane.b32.xlu0 %v937, 126
        %v957 = vpop.permute.xlu0 %956
        %958 = vrot.lane.b32.xlu0 %v938, 126
        %v959 = vpop.permute.xlu0 %958
        %v960 = vstv %s955
        %v961 = vmul.f32 %v960, %v957
        %v962 = vmul.f32 %v960, %v959
        %v963 = vadd.f32 %v953, %v961
        %v964 = vadd.f32 %v954, %v962
        %s965 = sld [smem:[#allocation3 + $0x50]]
        %966 = vrot.lane.b32.xlu0 %v937, 125
        %v967 = vpop.permute.xlu0 %966
        %968 = vrot.lane.b32.xlu0 %v938, 125
        %v969 = vpop.permute.xlu0 %968
        %v970 = vstv %s965
        %v971 = vmul.f32 %v970, %v967
        %v972 = vmul.f32 %v970, %v969
        %v973 = vadd.f32 %v963, %v971
        %v974 = vadd.f32 %v964, %v972
        %s975 = sld [smem:[#allocation3 + $0x51]]
        %976 = vrot.lane.b32.xlu0 %v937, 124
        %v977 = vpop.permute.xlu0 %976
        %978 = vrot.lane.b32.xlu0 %v938, 124
        %v979 = vpop.permute.xlu0 %978
        %v980 = vstv %s975
        %v981 = vmul.f32 %v980, %v977
        %v982 = vmul.f32 %v980, %v979
        %v983 = vadd.f32 %v973, %v981
        %v984 = vadd.f32 %v974, %v982
        %s985 = sld [smem:[#allocation3 + $0x52]]
        %986 = vrot.lane.b32.xlu0 %v937, 123
        %v987 = vpop.permute.xlu0 %986
        %988 = vrot.lane.b32.xlu0 %v938, 123
        %v989 = vpop.permute.xlu0 %988
        %v990 = vstv %s985
        %v991 = vmul.f32 %v990, %v987
        %v992 = vmul.f32 %v990, %v989
        %v993 = vadd.f32 %v983, %v991
        %v994 = vadd.f32 %v984, %v992
        %s995 = sld [smem:[#allocation3 + $0x53]]
        %996 = vrot.lane.b32.xlu0 %v937, 122
        %v997 = vpop.permute.xlu0 %996
        %998 = vrot.lane.b32.xlu0 %v938, 122
        %v999 = vpop.permute.xlu0 %998
        %v1000 = vstv %s995
        %v1001 = vmul.f32 %v1000, %v997
        %v1002 = vmul.f32 %v1000, %v999
        %v1003 = vadd.f32 %v993, %v1001
        %v1004 = vadd.f32 %v994, %v1002
        %v1005 = vld [vmem:[%s186 + $0x5] sm:$0xff]
        %v1006 = vld [vmem:[%s186 + $0xd] sm:$0xff]
        %s1007 = sld [smem:[#allocation3 + $0x54]]
        %v1008 = vstv %s1007
        %v1009 = vmul.f32 %v1008, %v1005
        %v1010 = vmul.f32 %v1008, %v1006
        %v1011 = vadd.f32 %v1003, %v1009
        %v1012 = vadd.f32 %v1004, %v1010
        %s1013 = sld [smem:[#allocation3 + $0x55]]
        %1014 = vrot.lane.b32.xlu0 %v1005, 127
        %v1015 = vpop.permute.xlu0 %1014
        %1016 = vrot.lane.b32.xlu0 %v1006, 127
        %v1017 = vpop.permute.xlu0 %1016
        %v1018 = vstv %s1013
        %v1019 = vmul.f32 %v1018, %v1015
        %v1020 = vmul.f32 %v1018, %v1017
        %v1021 = vadd.f32 %v1011, %v1019
        %v1022 = vadd.f32 %v1012, %v1020
        %s1023 = sld [smem:[#allocation3 + $0x56]]
        %1024 = vrot.lane.b32.xlu0 %v1005, 126
        %v1025 = vpop.permute.xlu0 %1024
        %1026 = vrot.lane.b32.xlu0 %v1006, 126
        %v1027 = vpop.permute.xlu0 %1026
        %v1028 = vstv %s1023
        %v1029 = vmul.f32 %v1028, %v1025
        %v1030 = vmul.f32 %v1028, %v1027
        %v1031 = vadd.f32 %v1021, %v1029
        %v1032 = vadd.f32 %v1022, %v1030
        %s1033 = sld [smem:[#allocation3 + $0x57]]
        %1034 = vrot.lane.b32.xlu0 %v1005, 125
        %v1035 = vpop.permute.xlu0 %1034
        %1036 = vrot.lane.b32.xlu0 %v1006, 125
        %v1037 = vpop.permute.xlu0 %1036
        %v1038 = vstv %s1033
        %v1039 = vmul.f32 %v1038, %v1035
        %v1040 = vmul.f32 %v1038, %v1037
        %v1041 = vadd.f32 %v1031, %v1039
        %v1042 = vadd.f32 %v1032, %v1040
        %s1043 = sld [smem:[#allocation3 + $0x58]]
        %1044 = vrot.lane.b32.xlu0 %v1005, 124
        %v1045 = vpop.permute.xlu0 %1044
        %1046 = vrot.lane.b32.xlu0 %v1006, 124
        %v1047 = vpop.permute.xlu0 %1046
        %v1048 = vstv %s1043
        %v1049 = vmul.f32 %v1048, %v1045
        %v1050 = vmul.f32 %v1048, %v1047
        %v1051 = vadd.f32 %v1041, %v1049
        %v1052 = vadd.f32 %v1042, %v1050
        %s1053 = sld [smem:[#allocation3 + $0x59]]
        %1054 = vrot.lane.b32.xlu0 %v1005, 123
        %v1055 = vpop.permute.xlu0 %1054
        %1056 = vrot.lane.b32.xlu0 %v1006, 123
        %v1057 = vpop.permute.xlu0 %1056
        %v1058 = vstv %s1053
        %v1059 = vmul.f32 %v1058, %v1055
        %v1060 = vmul.f32 %v1058, %v1057
        %v1061 = vadd.f32 %v1051, %v1059
        %v1062 = vadd.f32 %v1052, %v1060
        %s1063 = sld [smem:[#allocation3 + $0x5a]]
        %1064 = vrot.lane.b32.xlu0 %v1005, 122
        %v1065 = vpop.permute.xlu0 %1064
        %1066 = vrot.lane.b32.xlu0 %v1006, 122
        %v1067 = vpop.permute.xlu0 %1066
        %v1068 = vstv %s1063
        %v1069 = vmul.f32 %v1068, %v1065
        %v1070 = vmul.f32 %v1068, %v1067
        %v1071 = vadd.f32 %v1061, %v1069
        %v1072 = vadd.f32 %v1062, %v1070
        %v1073 = vld [vmem:[%s186 + $0x6] sm:$0xff]
        %v1074 = vld [vmem:[%s186 + $0xe] sm:$0xff]
        %s1075 = sld [smem:[#allocation3 + $0x5b]]
        %v1076 = vstv %s1075
        %v1077 = vmul.f32 %v1076, %v1073
        %v1078 = vmul.f32 %v1076, %v1074
        %v1079 = vadd.f32 %v1071, %v1077
        %v1080 = vadd.f32 %v1072, %v1078
        %s1081 = sld [smem:[#allocation3 + $0x5c]]
        %1082 = vrot.lane.b32.xlu0 %v1073, 127
        %v1083 = vpop.permute.xlu0 %1082
        %1084 = vrot.lane.b32.xlu0 %v1074, 127
        %v1085 = vpop.permute.xlu0 %1084
        %v1086 = vstv %s1081
        %v1087 = vmul.f32 %v1086, %v1083
        %v1088 = vmul.f32 %v1086, %v1085
        %v1089 = vadd.f32 %v1079, %v1087
        %v1090 = vadd.f32 %v1080, %v1088
        %s1091 = sld [smem:[#allocation3 + $0x5d]]
        %1092 = vrot.lane.b32.xlu0 %v1073, 126
        %v1093 = vpop.permute.xlu0 %1092
        %1094 = vrot.lane.b32.xlu0 %v1074, 126
        %v1095 = vpop.permute.xlu0 %1094
        %v1096 = vstv %s1091
        %v1097 = vmul.f32 %v1096, %v1093
        %v1098 = vmul.f32 %v1096, %v1095
        %v1099 = vadd.f32 %v1089, %v1097
        %v1100 = vadd.f32 %v1090, %v1098
        %s1101 = sld [smem:[#allocation3 + $0x5e]]
        %1102 = vrot.lane.b32.xlu0 %v1073, 125
        %v1103 = vpop.permute.xlu0 %1102
        %1104 = vrot.lane.b32.xlu0 %v1074, 125
        %v1105 = vpop.permute.xlu0 %1104
        %v1106 = vstv %s1101
        %v1107 = vmul.f32 %v1106, %v1103
        %v1108 = vmul.f32 %v1106, %v1105
        %v1109 = vadd.f32 %v1099, %v1107
        %v1110 = vadd.f32 %v1100, %v1108
        %s1111 = sld [smem:[#allocation3 + $0x5f]]
        %1112 = vrot.lane.b32.xlu0 %v1073, 124
        %v1113 = vpop.permute.xlu0 %1112
        %1114 = vrot.lane.b32.xlu0 %v1074, 124
        %v1115 = vpop.permute.xlu0 %1114
        %v1116 = vstv %s1111
        %v1117 = vmul.f32 %v1116, %v1113
        %v1118 = vmul.f32 %v1116, %v1115
        %v1119 = vadd.f32 %v1109, %v1117
        %v1120 = vadd.f32 %v1110, %v1118
        %s1121 = sld [smem:[#allocation3 + $0x60]]
        %1122 = vrot.lane.b32.xlu0 %v1073, 123
        %v1123 = vpop.permute.xlu0 %1122
        %1124 = vrot.lane.b32.xlu0 %v1074, 123
        %v1125 = vpop.permute.xlu0 %1124
        %v1126 = vstv %s1121
        %v1127 = vmul.f32 %v1126, %v1123
        %v1128 = vmul.f32 %v1126, %v1125
        %v1129 = vadd.f32 %v1119, %v1127
        %v1130 = vadd.f32 %v1120, %v1128
        %s1131 = sld [smem:[#allocation3 + $0x61]]
        %1132 = vrot.lane.b32.xlu0 %v1073, 122
        %v1133 = vpop.permute.xlu0 %1132
        %1134 = vrot.lane.b32.xlu0 %v1074, 122
        %v1135 = vpop.permute.xlu0 %1134
        %v1136 = vstv %s1131
        %v1137 = vmul.f32 %v1136, %v1133
        %v1138 = vmul.f32 %v1136, %v1135
        %v1139 = vadd.f32 %v1129, %v1137
        %v1140 = vadd.f32 %v1130, %v1138
        %v1141 = vsub.f32 0.0, %v1139
        %v1142 = vsub.f32 0.0, %v1140
        %v1143 = vmul.f32 %v1141, 1.442695
        %v1144 = vpow.pop %v1143
        %v1145 = vmul.f32 %v1142, 1.442695
        %v1146 = vpow.pop %v1145
        %v1147 = vadd.f32 %v1144, 1.0
        %v1148 = vadd.f32 %v1146, 1.0
        %v1149 = vrcp.pop %v1147
        %v1150 = vmul.f32 %v1147, %v1149
        %v1151 = vsub.f32 1.0, %v1150
        %v1152 = vmul.f32 %v1149, %v1151
        %v1153 = vadd.f32 %v1149, %v1152
        %vm1154 = vweird.f32 %v1147
        %vm1155 = vweird.f32 %v1149
        %vm1156 = vmor %vm1154, %vm1155
        %v1157 = vsel %vm1156, %v1149, %v1153
        %v1158 = vand.u32 2147483647, %v1147
        %vm1159 = vcmp.eq.f32.partialorder %v1158, 8.507059e+37
        %v1160 = vand.u32 %v1147, 2147483648
        %v1161 = vor.u32 1.1754944e-38, %v1160
        %v1162 = vsel %vm1159, %v1161, %v1157
        %v1163 = vmul.f32 1.0, %v1162
        %v1164 = vrcp.pop %v1148
        %v1165 = vmul.f32 %v1148, %v1164
        %v1166 = vsub.f32 1.0, %v1165
        %v1167 = vmul.f32 %v1164, %v1166
        %v1168 = vadd.f32 %v1164, %v1167
        %vm1169 = vweird.f32 %v1148
        %vm1170 = vweird.f32 %v1164
        %vm1171 = vmor %vm1169, %vm1170
        %v1172 = vsel %vm1171, %v1164, %v1168
        %v1173 = vand.u32 2147483647, %v1148
        %vm1174 = vcmp.eq.f32.partialorder %v1173, 8.507059e+37
        %v1175 = vand.u32 %v1148, 2147483648
        %v1176 = vor.u32 1.1754944e-38, %v1175
        %v1177 = vsel %vm1174, %v1176, %v1172
        %v1178 = vmul.f32 1.0, %v1177
        %vm1179 = vcmask 130048
        %1180 = vst.msk [vmem:[%s150] sm:$0xff] %vm1179, %v1163
        %1181 = vst.msk [vmem:[%s150 + $0x8] sm:$0xff] %vm1179, %v1178
        %s1182 = sand.u32 %s72, 1
        %s1183 = scalar_lea.sflag [#allocation4], %s1182
        %s1184 = sand.u32 %s72, 1
        %s1185 = smul.addr %s1184, 16
        %s1186 = scalar_lea.vmem [#allocation6], %s1185
        // Predicated region
        $region33: #{spatial_attention_forward.3} parent=27 // pred_check
          %p1187 = pneg %p82
        $region34: #{spatial_attention_forward.3} parent=27 // pred_check_branch
          %1189 = sbr.rel (%p1187) target = $region36
        $region35: #{spatial_attention_forward.3} parent=27 // pred_region
          %1191 = vsyncadd %s1183, 0
          %s1192 = smul.addr %s17, 2
          %s1193 = smul.addr %s1192, 8
          %s1194 = scalar_lea.hbm %s2, %s1193
          %s1195 = sshll.u32 %s1186, 4
          %s1196 = int_to_ptr.vmem [resolvable:$true] %s1195
          %s1197 = sshll.u32 %s1194, 4
          %s1198 = int_to_ptr.hbm [resolvable:$true] %s1197
          %1203 = dma.vmem_to_hbm [thread:$0]  %s1196, 256, %s1198, %s1183, 128, 128, 8
        $region36: #{spatial_attention_forward.3} parent=27 // pred_fallthru
          _
      $region28: #{spatial_attention_forward.3} parent=5 // pred_fallthru
        _
      %p1204 = scmp.le.s32.totalorder 2, %s12
      // Predicated region
      $region37: #{spatial_attention_forward.3} parent=5 // pred_check
        %p1205 = pneg %p1204
      $region38: #{spatial_attention_forward.3} parent=5 // pred_check_branch
        %1207 = sbr.rel (%p1205) target = $region40
      $region39: #{spatial_attention_forward.3} parent=5 // pred_region
        %s1208 = ssub.s32 %s12, 2
        // Predicated region
        $region41: #{spatial_attention_forward.3} parent=39 // pred_check
          %p1209 = pneg %p88
        $region42: #{spatial_attention_forward.3} parent=39 // pred_check_branch
          %1211 = sbr.rel (%p1209) target = $region44
        $region43: #{spatial_attention_forward.3} parent=39 // pred_region
          %s1212 = sand.u32 %s73, 1
          %s1213 = scalar_lea.sflag [#allocation4], %s1212
          %s1214 = sand.u32 %s73, 1
          %s1215 = smul.addr %s1214, 16
          %s1216 = scalar_lea.vmem [#allocation6], %s1215
          %1218 = dma.done %s1213, 256
        $region44: #{spatial_attention_forward.3} parent=39 // pred_fallthru
          _
      $region40: #{spatial_attention_forward.3} parent=5 // pred_fallthru
        _
    $region6: #{spatial_attention_forward.3} parent=1 // loop_footer
      %s16 = sadd.s32 1, %s12
    $region7: #{spatial_attention_forward.3} parent=1 // loop_footer_branch
      %11 = sbr.rel target = $region3
    $region8: #{spatial_attention_forward.3} parent=1 // loop_exit
      _
    %1219 = vsyncpa [#allocation4], 1
    %s1220 = scalar_lea.sflag [#allocation4], 1
    %1221 = vsyncpa %s1220, 1
    %1222 = vsyncpa [#allocation5], 1
    %s1223 = scalar_lea.sflag [#allocation5], 1
    %1224 = vsyncpa %s1223, 1

</llo_original>
